<compile_context>
chip_gen: v7x
topology: tpu7x:2x2x1
jax: 0.10.0
libtpu: 0.0.40
codegen_flags: <defaults>
</compile_context>

<pallas_src>
import math

import jax
import jax.numpy as jnp
from jax.experimental import pallas as pl
from jax.experimental.pallas import tpu as pltpu

_LANE = 128
_SUBLANE_BF16 = 16   # bf16 activations: keep batch tiles a multiple of 16


def _round_up(n, m):
    return ((n + m - 1) // m) * m


def _make_kernel(Tc, T, Hp, Np, BT):
    mask_tail = (T % Tc) != 0

    def kernel(x_ref, h0_ref, wx_ref, wh_ref, b_ref, out_ref, h_ref):
        tc = pl.program_id(1)

        @pl.when(tc == 0)
        def _():
            h_ref[...] = h0_ref[...]           # (re)initialize carry per batch tile

        wx = wx_ref[...]                               # (Ip, Np) bf16, resident
        wh = wh_ref[...]                               # (Hp, Np) bf16, resident
        bias = jnp.broadcast_to(b_ref[...], (BT, Np))  # hoisted out of the loop
        t0 = tc * Tc

        def step(t, h):
            x = x_ref[t]                               # (BT, Ip) bf16
            # One x-dot + one h-dot against the fused (i2h | i2o) weight slab.
            y = (jnp.dot(x, wx, preferred_element_type=jnp.float32)
                 + jnp.dot(h.astype(jnp.bfloat16), wh,
                           preferred_element_type=jnp.float32)
                 + bias)                               # (BT, Hp + Op) f32
            logits = y[:, Hp:]                         # padded lanes hold ~-1e30
            m = jnp.max(logits, axis=1, keepdims=True)
            shifted = logits - m
            lse = jnp.log(jnp.sum(jnp.exp(shifted), axis=1, keepdims=True))
            out_ref[t] = shifted - lse
            h_new = y[:, :Hp]
            if mask_tail:                              # padded steps: keep old carry
                h_new = jnp.where(t0 + t < T, h_new, h)
            return h_new

        h_ref[...] = jax.lax.fori_loop(0, Tc, step, h_ref[...], unroll=True)

    return kernel


def rnn_sequence(xs, h0, w_i2h, b_i2h, w_i2o, b_i2o, *, time_chunk=16):
    """Runs the RNN cell over a whole sequence in a single fused kernel.

    Args:
      xs:    (T, B, I) inputs, one step per leading index.
      h0:    (B, H)    initial hidden state.
      w_i2h: (I+H, H)  i2h weight, (in_features, out_features) layout.
      b_i2h: (1, H) or (H,)
      w_i2o: (I+H, O)  i2o weight.
      b_i2o: (1, O) or (O,)

    Returns:
      outputs: (T, B, O) per-step log-softmax outputs.
      h_final: (B, H)    final hidden state.
    """
    T, B, I = xs.shape
    H = w_i2h.shape[1]
    O = w_i2o.shape[1]

    f32, bf16 = jnp.float32, jnp.bfloat16

    # ---- padded / tiled sizes ------------------------------------------------
    Ip = _round_up(I, _LANE)
    Hp = _round_up(H, _LANE)
    Op = _round_up(O, _LANE)
    Np = Hp + Op

    Bp = _round_up(B, _SUBLANE_BF16)
    if Bp > _SUBLANE_BF16:
        # >=2 batch tiles so the "parallel" axis can shard across both v7x cores.
        BT = min(64, _round_up(Bp // 2, _SUBLANE_BF16))
        Bp = _round_up(Bp, BT)
    else:
        BT = Bp
    nbt = Bp // BT

    Tc = max(1, min(time_chunk, T))
    Tp = _round_up(T, Tc)
    ntc = Tp // Tc

    # ---- host-side weight prep (fused i2h|i2o slab, split x/h contraction) ----
    wx = jnp.zeros((Ip, Np), f32)
    wx = wx.at[:I, :H].set(w_i2h[:I].astype(f32))
    wx = wx.at[:I, Hp:Hp + O].set(w_i2o[:I].astype(f32))
    wh = jnp.zeros((Hp, Np), f32)
    wh = wh.at[:H, :H].set(w_i2h[I:].astype(f32))
    wh = wh.at[:H, Hp:Hp + O].set(w_i2o[I:].astype(f32))
    wx = wx.astype(bf16)
    wh = wh.astype(bf16)

    b = jnp.zeros((1, Np), f32)
    b = b.at[:, :H].set(b_i2h.reshape(1, H).astype(f32))
    b = b.at[:, Hp:Hp + O].set(b_i2o.reshape(1, O).astype(f32))
    b = b.at[:, Hp + O:].set(-1e30)      # padded logit lanes vanish in the lse

    xs_p = jnp.zeros((Tp, Bp, Ip), bf16).at[:T, :B, :I].set(xs.astype(bf16))
    h0_p = jnp.zeros((Bp, Hp), f32).at[:B, :H].set(h0.astype(f32))

    # ---- VMEM budget & cost hint ----------------------------------------------
    wbytes = (Ip + Hp) * Np * 2 + Np * 4        # single-buffered bf16 weights + bias
    xbytes = 2 * Tc * BT * Ip * 2               # double-buffered x chunk (bf16)
    obytes = 2 * Tc * BT * Op * 4               # double-buffered out chunk (f32)
    hbytes = 4 * BT * Hp * 4                    # h0 in + h carry out
    vmem_limit = int(min(max((wbytes + xbytes + obytes + hbytes) * 5 // 4
                             + (2 << 20), 4 << 20), 64 << 20))
    cost = pl.CostEstimate(
        flops=2 * Tp * Bp * (Ip + Hp) * Np,
        transcendentals=Tp * Bp * (Op + 1),
        bytes_accessed=int(xs_p.size * 2 + Tp * Bp * Op * 4 + wbytes + Bp * Hp * 8))

    kernel = _make_kernel(Tc, T, Hp, Np, BT)
    resident = pl.Buffered(buffer_count=1)      # constant index_map -> no double buffer

    outs_p, h_final_p = pl.pallas_call(
        kernel,
        out_shape=(
            jax.ShapeDtypeStruct((Tp, Bp, Op), f32),    # per-step log-softmax
            jax.ShapeDtypeStruct((Bp, Hp), f32),        # final hidden
        ),
        grid=(nbt, ntc),
        in_specs=[
            pl.BlockSpec((Tc, BT, Ip), lambda bt, tc: (tc, bt, 0)),    # x chunk
            pl.BlockSpec((BT, Hp), lambda bt, tc: (bt, 0)),             # h0
            pl.BlockSpec((Ip, Np), lambda bt, tc: (0, 0),
                         pipeline_mode=resident),                       # Wx (resident)
            pl.BlockSpec((Hp, Np), lambda bt, tc: (0, 0),
                         pipeline_mode=resident),                       # Wh (resident)
            pl.BlockSpec((1, Np), lambda bt, tc: (0, 0),
                         pipeline_mode=resident),                       # bias (resident)
        ],
        out_specs=(
            pl.BlockSpec((Tc, BT, Op), lambda bt, tc: (tc, bt, 0)),
            pl.BlockSpec((BT, Hp), lambda bt, tc: (bt, 0)),             # VMEM carry
        ),
        compiler_params=pltpu.CompilerParams(
            dimension_semantics=("parallel", "arbitrary"),
            vmem_limit_bytes=vmem_limit),
        cost_estimate=cost,
    )(xs_p, h0_p, wx, wh, b)

    return outs_p[:T, :B, :O], h_final_p[:B, :H]


def rnn_cell(x, h, w_i2h, b_i2h, w_i2o, b_i2o):
    """Single-step forward, matching the PyTorch module's forward()."""
    out, h_new = rnn_sequence(x[None], h, w_i2h, b_i2h, w_i2o, b_i2o)
    return out[0], h_new


def init_params(key, input_size, hidden_size, output_size):
    """nn.Linear-style U(-1/sqrt(fan_in), +1/sqrt(fan_in)) init.

    Weights stored transposed vs. PyTorch: (in_features, out_features)."""
    k1, k2, k3, k4 = jax.random.split(key, 4)
    fan_in = input_size + hidden_size
    bound = 1.0 / math.sqrt(fan_in)
    w_i2h = jax.random.uniform(k1, (fan_in, hidden_size), jnp.float32, -bound, bound)
    b_i2h = jax.random.uniform(k2, (1, hidden_size), jnp.float32, -bound, bound)
    w_i2o = jax.random.uniform(k3, (fan_in, output_size), jnp.float32, -bound, bound)
    b_i2o = jax.random.uniform(k4, (1, output_size), jnp.float32, -bound, bound)
    return w_i2h, b_i2h, w_i2o, b_i2o


if __name__ == "__main__":
    input_size, hidden_size, output_size = 16, 32, 8
    batch, seq_len = 2, 8

    key = jax.random.PRNGKey(0)
    kp, kx = jax.random.split(key)

    w_i2h, b_i2h, w_i2o, b_i2o = init_params(kp, input_size, hidden_size, output_size)
    xs = jax.random.normal(kx, (seq_len, batch, input_size), jnp.float32)
    h0 = jnp.zeros((batch, hidden_size), jnp.float32)   # RNN.initHidden per row

    run = jax.jit(rnn_sequence)
    outs, h_final = run(xs, h0, w_i2h, b_i2h, w_i2o, b_i2o)
    jax.block_until_ready((outs, h_final))

    # Pure-JAX reference mirroring the kernel numerics: bf16 dot operands,
    # f32 accumulation / carry / bias / log-softmax.
    def q(a):
        return a.astype(jnp.bfloat16).astype(jnp.float32)

    w_i2h_q, w_i2o_q = q(w_i2h), q(w_i2o)
    h_ref = h0
    ref_outs = []
    for t in range(seq_len):
        comb = jnp.concatenate([q(xs[t]), q(h_ref)], axis=1)
        h_ref = comb @ w_i2h_q + b_i2h.reshape(1, -1)
        logits = comb @ w_i2o_q + b_i2o.reshape(1, -1)
        ref_outs.append(jax.nn.log_softmax(logits, axis=1))
    ref_outs = jnp.stack(ref_outs)

    assert outs.shape == (seq_len, batch, output_size)
    assert h_final.shape == (batch, hidden_size)
    assert float(jnp.max(jnp.abs(outs - ref_outs))) < 2e-2, "sequence output mismatch"
    assert float(jnp.max(jnp.abs(h_final - h_ref))) < 2e-2, "final hidden mismatch"

    # Single-step API parity with the PyTorch module's forward().
    out1, h1 = rnn_cell(xs[0], h0, w_i2h, b_i2h, w_i2o, b_i2o)
    assert float(jnp.max(jnp.abs(out1 - ref_outs[0]))) < 2e-2, "single-step output mismatch"

    print("KERNEL_OK")
</pallas_src>

<mosaic_0001>
module attributes {stable_mosaic.version = 11 : i64} {
  func.func @kernel(%arg0: i32, %arg1: i32, %arg2: memref<8x16x128xbf16, #tpu.memory_space<vmem>>, %arg3: memref<16x128xf32, #tpu.memory_space<vmem>>, %arg4: memref<128x256xbf16, #tpu.memory_space<vmem>>, %arg5: memref<128x256xbf16, #tpu.memory_space<vmem>>, %arg6: memref<1x256xf32, #tpu.memory_space<vmem>>, %arg7: memref<8x16x128xf32, #tpu.memory_space<vmem>>, %arg8: memref<16x128xf32, #tpu.memory_space<vmem>>) attributes {dimension_semantics = [#tpu.dimension_semantics<parallel>, #tpu.dimension_semantics<arbitrary>], iteration_bounds = array<i64: 1, 1>, scalar_prefetch = 0 : i64, scratch_operands = 0 : i64, tpu.core_type = #tpu.core_type<tc>, window_params = [{transform_indices = @transform_0, window_bounds = array<i64: 8, 16, 128>}, {transform_indices = @transform_1, window_bounds = array<i64: 16, 128>}, {pipeline_mode = #tpu.pipeline_mode<synchronous>, transform_indices = @transform_2, window_bounds = array<i64: 128, 256>}, {pipeline_mode = #tpu.pipeline_mode<synchronous>, transform_indices = @transform_3, window_bounds = array<i64: 128, 256>}, {pipeline_mode = #tpu.pipeline_mode<synchronous>, transform_indices = @transform_4, window_bounds = array<i64: 1, 256>}, {transform_indices = @transform_5, window_bounds = array<i64: 8, 16, 128>}, {transform_indices = @transform_6, window_bounds = array<i64: 16, 128>}]} {
    %c0_i32 = arith.constant 0 : i32
    %0 = arith.cmpi eq, %arg1, %c0_i32 : i32
    %1 = arith.extui %0 : i1 to i32
    %c0_i32_0 = arith.constant 0 : i32
    %2 = arith.cmpi ne, %1, %c0_i32_0 : i32
    scf.if %2 {
      %c0_74 = arith.constant 0 : index
      %c0_75 = arith.constant 0 : index
      %202 = vector.load %arg3[%c0_74, %c0_75] : memref<16x128xf32, #tpu.memory_space<vmem>>, vector<16x128xf32>
      %c0_76 = arith.constant 0 : index
      %c0_77 = arith.constant 0 : index
      %203 = vector.load %arg8[%c0_76, %c0_77] : memref<16x128xf32, #tpu.memory_space<vmem>>, vector<16x128xf32>
      tpu.vector_store %arg8[%c0_76, %c0_77], %202 {strides = array<i32>} : memref<16x128xf32, #tpu.memory_space<vmem>>, vector<16x128xf32>,
    } else {
    }
    %c0 = arith.constant 0 : index
    %c0_1 = arith.constant 0 : index
    %3 = vector.load %arg4[%c0, %c0_1] : memref<128x256xbf16, #tpu.memory_space<vmem>>, vector<128x256xbf16>
    %c0_2 = arith.constant 0 : index
    %c0_3 = arith.constant 0 : index
    %4 = vector.load %arg5[%c0_2, %c0_3] : memref<128x256xbf16, #tpu.memory_space<vmem>>, vector<128x256xbf16>
    %c0_4 = arith.constant 0 : index
    %c0_5 = arith.constant 0 : index
    %5 = vector.load %arg6[%c0_4, %c0_5] : memref<1x256xf32, #tpu.memory_space<vmem>>, vector<1x256xf32>
    %6 = vector.shape_cast %5 : vector<1x256xf32> to vector<1x256xf32>
    %7 = vector.broadcast %6 : vector<1x256xf32> to vector<16x256xf32>
    %c0_6 = arith.constant 0 : index
    %c0_7 = arith.constant 0 : index
    %8 = vector.load %arg8[%c0_6, %c0_7] : memref<16x128xf32, #tpu.memory_space<vmem>>, vector<16x128xf32>
    %c0_i32_8 = arith.constant 0 : i32
    %9 = arith.index_cast %c0_i32_8 : i32 to index
    %c0_9 = arith.constant 0 : index
    %c0_10 = arith.constant 0 : index
    %10 = vector.load %arg2[%9, %c0_9, %c0_10] : memref<8x16x128xbf16, #tpu.memory_space<vmem>>, vector<1x16x128xbf16>
    %11 = vector.shape_cast %10 : vector<1x16x128xbf16> to vector<16x128xbf16>
    %cst = arith.constant dense<0.000000e+00> : vector<16x256xf32>
    %12 = tpu.matmul %11, %3, %cst {dimension_numbers = #tpu.dot_dimension_numbers<[1], [0], [0], [1], [0, 0, 1, 1], [], []>} : vector<16x128xbf16>, vector<128x256xbf16>, vector<16x256xf32> -> vector<16x256xf32>
    %13 = arith.truncf %8 : vector<16x128xf32> to vector<16x128xbf16>
    %cst_11 = arith.constant dense<0.000000e+00> : vector<16x256xf32>
    %14 = tpu.matmul %13, %4, %cst_11 {dimension_numbers = #tpu.dot_dimension_numbers<[1], [0], [0], [1], [0, 0, 1, 1], [], []>} : vector<16x128xbf16>, vector<128x256xbf16>, vector<16x256xf32> -> vector<16x256xf32>
    %15 = arith.addf %12, %14 : vector<16x256xf32>
    %16 = arith.addf %15, %7 : vector<16x256xf32>
    %17 = vector.extract_strided_slice %16 {offsets = [0, 128], sizes = [16, 128], strides = [1, 1]} : vector<16x256xf32> to vector<16x128xf32>
    %cst_12 = arith.constant dense<0xFF800000> : vector<16xf32>
    %18 = vector.multi_reduction <maximumf>, %17, %cst_12 [1] : vector<16x128xf32> to vector<16xf32>
    %19 = vector.shape_cast %18 : vector<16xf32> to vector<16x1xf32>
    %20 = vector.broadcast %19 : vector<16x1xf32> to vector<16x128xf32>
    %21 = arith.subf %17, %20 : vector<16x128xf32>
    %22 = math.exp %21 : vector<16x128xf32>
    %cst_13 = arith.constant dense<0.000000e+00> : vector<16xf32>
    %23 = vector.multi_reduction <add>, %22, %cst_13 [1] : vector<16x128xf32> to vector<16xf32>
    %24 = vector.shape_cast %23 : vector<16xf32> to vector<16x1xf32>
    %25 = math.log %24 : vector<16x1xf32>
    %26 = vector.broadcast %25 : vector<16x1xf32> to vector<16x128xf32>
    %27 = arith.subf %21, %26 : vector<16x128xf32>
    %28 = arith.index_cast %c0_i32_8 : i32 to index
    %c0_14 = arith.constant 0 : index
    %c0_15 = arith.constant 0 : index
    %29 = vector.load %arg7[%28, %c0_14, %c0_15] : memref<8x16x128xf32, #tpu.memory_space<vmem>>, vector<1x16x128xf32>
    %30 = vector.shape_cast %29 : vector<1x16x128xf32> to vector<16x128xf32>
    %31 = vector.shape_cast %27 : vector<16x128xf32> to vector<1x16x128xf32>
    tpu.vector_store %arg7[%28, %c0_14, %c0_15], %31 {strides = array<i32>} : memref<8x16x128xf32, #tpu.memory_space<vmem>>, vector<1x16x128xf32>,
    %32 = vector.extract_strided_slice %16 {offsets = [0, 0], sizes = [16, 128], strides = [1, 1]} : vector<16x256xf32> to vector<16x128xf32>
    %c1_i32 = arith.constant 1 : i32
    %33 = arith.index_cast %c1_i32 : i32 to index
    %c0_16 = arith.constant 0 : index
    %c0_17 = arith.constant 0 : index
    %34 = vector.load %arg2[%33, %c0_16, %c0_17] : memref<8x16x128xbf16, #tpu.memory_space<vmem>>, vector<1x16x128xbf16>
    %35 = vector.shape_cast %34 : vector<1x16x128xbf16> to vector<16x128xbf16>
    %cst_18 = arith.constant dense<0.000000e+00> : vector<16x256xf32>
    %36 = tpu.matmul %35, %3, %cst_18 {dimension_numbers = #tpu.dot_dimension_numbers<[1], [0], [0], [1], [0, 0, 1, 1], [], []>} : vector<16x128xbf16>, vector<128x256xbf16>, vector<16x256xf32> -> vector<16x256xf32>
    %37 = arith.truncf %32 : vector<16x128xf32> to vector<16x128xbf16>
    %cst_19 = arith.constant dense<0.000000e+00> : vector<16x256xf32>
    %38 = tpu.matmul %37, %4, %cst_19 {dimension_numbers = #tpu.dot_dimension_numbers<[1], [0], [0], [1], [0, 0, 1, 1], [], []>} : vector<16x128xbf16>, vector<128x256xbf16>, vector<16x256xf32> -> vector<16x256xf32>
    %39 = arith.addf %36, %38 : vector<16x256xf32>
    %40 = arith.addf %39, %7 : vector<16x256xf32>
    %41 = vector.extract_strided_slice %40 {offsets = [0, 128], sizes = [16, 128], strides = [1, 1]} : vector<16x256xf32> to vector<16x128xf32>
    %cst_20 = arith.constant dense<0xFF800000> : vector<16xf32>
    %42 = vector.multi_reduction <maximumf>, %41, %cst_20 [1] : vector<16x128xf32> to vector<16xf32>
    %43 = vector.shape_cast %42 : vector<16xf32> to vector<16x1xf32>
    %44 = vector.broadcast %43 : vector<16x1xf32> to vector<16x128xf32>
    %45 = arith.subf %41, %44 : vector<16x128xf32>
    %46 = math.exp %45 : vector<16x128xf32>
    %cst_21 = arith.constant dense<0.000000e+00> : vector<16xf32>
    %47 = vector.multi_reduction <add>, %46, %cst_21 [1] : vector<16x128xf32> to vector<16xf32>
    %48 = vector.shape_cast %47 : vector<16xf32> to vector<16x1xf32>
    %49 = math.log %48 : vector<16x1xf32>
    %50 = vector.broadcast %49 : vector<16x1xf32> to vector<16x128xf32>
    %51 = arith.subf %45, %50 : vector<16x128xf32>
    %52 = arith.index_cast %c1_i32 : i32 to index
    %c0_22 = arith.constant 0 : index
    %c0_23 = arith.constant 0 : index
    %53 = vector.load %arg7[%52, %c0_22, %c0_23] : memref<8x16x128xf32, #tpu.memory_space<vmem>>, vector<1x16x128xf32>
    %54 = vector.shape_cast %53 : vector<1x16x128xf32> to vector<16x128xf32>
    %55 = vector.shape_cast %51 : vector<16x128xf32> to vector<1x16x128xf32>
    tpu.vector_store %arg7[%52, %c0_22, %c0_23], %55 {strides = array<i32>} : memref<8x16x128xf32, #tpu.memory_space<vmem>>, vector<1x16x128xf32>,
    %56 = vector.extract_strided_slice %40 {offsets = [0, 0], sizes = [16, 128], strides = [1, 1]} : vector<16x256xf32> to vector<16x128xf32>
    %c2_i32 = arith.constant 2 : i32
    %57 = arith.index_cast %c2_i32 : i32 to index
    %c0_24 = arith.constant 0 : index
    %c0_25 = arith.constant 0 : index
    %58 = vector.load %arg2[%57, %c0_24, %c0_25] : memref<8x16x128xbf16, #tpu.memory_space<vmem>>, vector<1x16x128xbf16>
    %59 = vector.shape_cast %58 : vector<1x16x128xbf16> to vector<16x128xbf16>
    %cst_26 = arith.constant dense<0.000000e+00> : vector<16x256xf32>
    %60 = tpu.matmul %59, %3, %cst_26 {dimension_numbers = #tpu.dot_dimension_numbers<[1], [0], [0], [1], [0, 0, 1, 1], [], []>} : vector<16x128xbf16>, vector<128x256xbf16>, vector<16x256xf32> -> vector<16x256xf32>
    %61 = arith.truncf %56 : vector<16x128xf32> to vector<16x128xbf16>
    %cst_27 = arith.constant dense<0.000000e+00> : vector<16x256xf32>
    %62 = tpu.matmul %61, %4, %cst_27 {dimension_numbers = #tpu.dot_dimension_numbers<[1], [0], [0], [1], [0, 0, 1, 1], [], []>} : vector<16x128xbf16>, vector<128x256xbf16>, vector<16x256xf32> -> vector<16x256xf32>
    %63 = arith.addf %60, %62 : vector<16x256xf32>
    %64 = arith.addf %63, %7 : vector<16x256xf32>
    %65 = vector.extract_strided_slice %64 {offsets = [0, 128], sizes = [16, 128], strides = [1, 1]} : vector<16x256xf32> to vector<16x128xf32>
    %cst_28 = arith.constant dense<0xFF800000> : vector<16xf32>
    %66 = vector.multi_reduction <maximumf>, %65, %cst_28 [1] : vector<16x128xf32> to vector<16xf32>
    %67 = vector.shape_cast %66 : vector<16xf32> to vector<16x1xf32>
    %68 = vector.broadcast %67 : vector<16x1xf32> to vector<16x128xf32>
    %69 = arith.subf %65, %68 : vector<16x128xf32>
    %70 = math.exp %69 : vector<16x128xf32>
    %cst_29 = arith.constant dense<0.000000e+00> : vector<16xf32>
    %71 = vector.multi_reduction <add>, %70, %cst_29 [1] : vector<16x128xf32> to vector<16xf32>
    %72 = vector.shape_cast %71 : vector<16xf32> to vector<16x1xf32>
    %73 = math.log %72 : vector<16x1xf32>
    %74 = vector.broadcast %73 : vector<16x1xf32> to vector<16x128xf32>
    %75 = arith.subf %69, %74 : vector<16x128xf32>
    %76 = arith.index_cast %c2_i32 : i32 to index
    %c0_30 = arith.constant 0 : index
    %c0_31 = arith.constant 0 : index
    %77 = vector.load %arg7[%76, %c0_30, %c0_31] : memref<8x16x128xf32, #tpu.memory_space<vmem>>, vector<1x16x128xf32>
    %78 = vector.shape_cast %77 : vector<1x16x128xf32> to vector<16x128xf32>
    %79 = vector.shape_cast %75 : vector<16x128xf32> to vector<1x16x128xf32>
    tpu.vector_store %arg7[%76, %c0_30, %c0_31], %79 {strides = array<i32>} : memref<8x16x128xf32, #tpu.memory_space<vmem>>, vector<1x16x128xf32>,
    %80 = vector.extract_strided_slice %64 {offsets = [0, 0], sizes = [16, 128], strides = [1, 1]} : vector<16x256xf32> to vector<16x128xf32>
    %c3_i32 = arith.constant 3 : i32
    %81 = arith.index_cast %c3_i32 : i32 to index
    %c0_32 = arith.constant 0 : index
    %c0_33 = arith.constant 0 : index
    %82 = vector.load %arg2[%81, %c0_32, %c0_33] : memref<8x16x128xbf16, #tpu.memory_space<vmem>>, vector<1x16x128xbf16>
    %83 = vector.shape_cast %82 : vector<1x16x128xbf16> to vector<16x128xbf16>
    %cst_34 = arith.constant dense<0.000000e+00> : vector<16x256xf32>
    %84 = tpu.matmul %83, %3, %cst_34 {dimension_numbers = #tpu.dot_dimension_numbers<[1], [0], [0], [1], [0, 0, 1, 1], [], []>} : vector<16x128xbf16>, vector<128x256xbf16>, vector<16x256xf32> -> vector<16x256xf32>
    %85 = arith.truncf %80 : vector<16x128xf32> to vector<16x128xbf16>
    %cst_35 = arith.constant dense<0.000000e+00> : vector<16x256xf32>
    %86 = tpu.matmul %85, %4, %cst_35 {dimension_numbers = #tpu.dot_dimension_numbers<[1], [0], [0], [1], [0, 0, 1, 1], [], []>} : vector<16x128xbf16>, vector<128x256xbf16>, vector<16x256xf32> -> vector<16x256xf32>
    %87 = arith.addf %84, %86 : vector<16x256xf32>
    %88 = arith.addf %87, %7 : vector<16x256xf32>
    %89 = vector.extract_strided_slice %88 {offsets = [0, 128], sizes = [16, 128], strides = [1, 1]} : vector<16x256xf32> to vector<16x128xf32>
    %cst_36 = arith.constant dense<0xFF800000> : vector<16xf32>
    %90 = vector.multi_reduction <maximumf>, %89, %cst_36 [1] : vector<16x128xf32> to vector<16xf32>
    %91 = vector.shape_cast %90 : vector<16xf32> to vector<16x1xf32>
    %92 = vector.broadcast %91 : vector<16x1xf32> to vector<16x128xf32>
    %93 = arith.subf %89, %92 : vector<16x128xf32>
    %94 = math.exp %93 : vector<16x128xf32>
    %cst_37 = arith.constant dense<0.000000e+00> : vector<16xf32>
    %95 = vector.multi_reduction <add>, %94, %cst_37 [1] : vector<16x128xf32> to vector<16xf32>
    %96 = vector.shape_cast %95 : vector<16xf32> to vector<16x1xf32>
    %97 = math.log %96 : vector<16x1xf32>
    %98 = vector.broadcast %97 : vector<16x1xf32> to vector<16x128xf32>
    %99 = arith.subf %93, %98 : vector<16x128xf32>
    %100 = arith.index_cast %c3_i32 : i32 to index
    %c0_38 = arith.constant 0 : index
    %c0_39 = arith.constant 0 : index
    %101 = vector.load %arg7[%100, %c0_38, %c0_39] : memref<8x16x128xf32, #tpu.memory_space<vmem>>, vector<1x16x128xf32>
    %102 = vector.shape_cast %101 : vector<1x16x128xf32> to vector<16x128xf32>
    %103 = vector.shape_cast %99 : vector<16x128xf32> to vector<1x16x128xf32>
    tpu.vector_store %arg7[%100, %c0_38, %c0_39], %103 {strides = array<i32>} : memref<8x16x128xf32, #tpu.memory_space<vmem>>, vector<1x16x128xf32>,
    %104 = vector.extract_strided_slice %88 {offsets = [0, 0], sizes = [16, 128], strides = [1, 1]} : vector<16x256xf32> to vector<16x128xf32>
    %c4_i32 = arith.constant 4 : i32
    %105 = arith.index_cast %c4_i32 : i32 to index
    %c0_40 = arith.constant 0 : index
    %c0_41 = arith.constant 0 : index
    %106 = vector.load %arg2[%105, %c0_40, %c0_41] : memref<8x16x128xbf16, #tpu.memory_space<vmem>>, vector<1x16x128xbf16>
    %107 = vector.shape_cast %106 : vector<1x16x128xbf16> to vector<16x128xbf16>
    %cst_42 = arith.constant dense<0.000000e+00> : vector<16x256xf32>
    %108 = tpu.matmul %107, %3, %cst_42 {dimension_numbers = #tpu.dot_dimension_numbers<[1], [0], [0], [1], [0, 0, 1, 1], [], []>} : vector<16x128xbf16>, vector<128x256xbf16>, vector<16x256xf32> -> vector<16x256xf32>
    %109 = arith.truncf %104 : vector<16x128xf32> to vector<16x128xbf16>
    %cst_43 = arith.constant dense<0.000000e+00> : vector<16x256xf32>
    %110 = tpu.matmul %109, %4, %cst_43 {dimension_numbers = #tpu.dot_dimension_numbers<[1], [0], [0], [1], [0, 0, 1, 1], [], []>} : vector<16x128xbf16>, vector<128x256xbf16>, vector<16x256xf32> -> vector<16x256xf32>
    %111 = arith.addf %108, %110 : vector<16x256xf32>
    %112 = arith.addf %111, %7 : vector<16x256xf32>
    %113 = vector.extract_strided_slice %112 {offsets = [0, 128], sizes = [16, 128], strides = [1, 1]} : vector<16x256xf32> to vector<16x128xf32>
    %cst_44 = arith.constant dense<0xFF800000> : vector<16xf32>
    %114 = vector.multi_reduction <maximumf>, %113, %cst_44 [1] : vector<16x128xf32> to vector<16xf32>
    %115 = vector.shape_cast %114 : vector<16xf32> to vector<16x1xf32>
    %116 = vector.broadcast %115 : vector<16x1xf32> to vector<16x128xf32>
    %117 = arith.subf %113, %116 : vector<16x128xf32>
    %118 = math.exp %117 : vector<16x128xf32>
    %cst_45 = arith.constant dense<0.000000e+00> : vector<16xf32>
    %119 = vector.multi_reduction <add>, %118, %cst_45 [1] : vector<16x128xf32> to vector<16xf32>
    %120 = vector.shape_cast %119 : vector<16xf32> to vector<16x1xf32>
    %121 = math.log %120 : vector<16x1xf32>
    %122 = vector.broadcast %121 : vector<16x1xf32> to vector<16x128xf32>
    %123 = arith.subf %117, %122 : vector<16x128xf32>
    %124 = arith.index_cast %c4_i32 : i32 to index
    %c0_46 = arith.constant 0 : index
    %c0_47 = arith.constant 0 : index
    %125 = vector.load %arg7[%124, %c0_46, %c0_47] : memref<8x16x128xf32, #tpu.memory_space<vmem>>, vector<1x16x128xf32>
    %126 = vector.shape_cast %125 : vector<1x16x128xf32> to vector<16x128xf32>
    %127 = vector.shape_cast %123 : vector<16x128xf32> to vector<1x16x128xf32>
    tpu.vector_store %arg7[%124, %c0_46, %c0_47], %127 {strides = array<i32>} : memref<8x16x128xf32, #tpu.memory_space<vmem>>, vector<1x16x128xf32>,
    %128 = vector.extract_strided_slice %112 {offsets = [0, 0], sizes = [16, 128], strides = [1, 1]} : vector<16x256xf32> to vector<16x128xf32>
    %c5_i32 = arith.constant 5 : i32
    %129 = arith.index_cast %c5_i32 : i32 to index
    %c0_48 = arith.constant 0 : index
    %c0_49 = arith.constant 0 : index
    %130 = vector.load %arg2[%129, %c0_48, %c0_49] : memref<8x16x128xbf16, #tpu.memory_space<vmem>>, vector<1x16x128xbf16>
    %131 = vector.shape_cast %130 : vector<1x16x128xbf16> to vector<16x128xbf16>
    %cst_50 = arith.constant dense<0.000000e+00> : vector<16x256xf32>
    %132 = tpu.matmul %131, %3, %cst_50 {dimension_numbers = #tpu.dot_dimension_numbers<[1], [0], [0], [1], [0, 0, 1, 1], [], []>} : vector<16x128xbf16>, vector<128x256xbf16>, vector<16x256xf32> -> vector<16x256xf32>
    %133 = arith.truncf %128 : vector<16x128xf32> to vector<16x128xbf16>
    %cst_51 = arith.constant dense<0.000000e+00> : vector<16x256xf32>
    %134 = tpu.matmul %133, %4, %cst_51 {dimension_numbers = #tpu.dot_dimension_numbers<[1], [0], [0], [1], [0, 0, 1, 1], [], []>} : vector<16x128xbf16>, vector<128x256xbf16>, vector<16x256xf32> -> vector<16x256xf32>
    %135 = arith.addf %132, %134 : vector<16x256xf32>
    %136 = arith.addf %135, %7 : vector<16x256xf32>
    %137 = vector.extract_strided_slice %136 {offsets = [0, 128], sizes = [16, 128], strides = [1, 1]} : vector<16x256xf32> to vector<16x128xf32>
    %cst_52 = arith.constant dense<0xFF800000> : vector<16xf32>
    %138 = vector.multi_reduction <maximumf>, %137, %cst_52 [1] : vector<16x128xf32> to vector<16xf32>
    %139 = vector.shape_cast %138 : vector<16xf32> to vector<16x1xf32>
    %140 = vector.broadcast %139 : vector<16x1xf32> to vector<16x128xf32>
    %141 = arith.subf %137, %140 : vector<16x128xf32>
    %142 = math.exp %141 : vector<16x128xf32>
    %cst_53 = arith.constant dense<0.000000e+00> : vector<16xf32>
    %143 = vector.multi_reduction <add>, %142, %cst_53 [1] : vector<16x128xf32> to vector<16xf32>
    %144 = vector.shape_cast %143 : vector<16xf32> to vector<16x1xf32>
    %145 = math.log %144 : vector<16x1xf32>
    %146 = vector.broadcast %145 : vector<16x1xf32> to vector<16x128xf32>
    %147 = arith.subf %141, %146 : vector<16x128xf32>
    %148 = arith.index_cast %c5_i32 : i32 to index
    %c0_54 = arith.constant 0 : index
    %c0_55 = arith.constant 0 : index
    %149 = vector.load %arg7[%148, %c0_54, %c0_55] : memref<8x16x128xf32, #tpu.memory_space<vmem>>, vector<1x16x128xf32>
    %150 = vector.shape_cast %149 : vector<1x16x128xf32> to vector<16x128xf32>
    %151 = vector.shape_cast %147 : vector<16x128xf32> to vector<1x16x128xf32>
    tpu.vector_store %arg7[%148, %c0_54, %c0_55], %151 {strides = array<i32>} : memref<8x16x128xf32, #tpu.memory_space<vmem>>, vector<1x16x128xf32>,
    %152 = vector.extract_strided_slice %136 {offsets = [0, 0], sizes = [16, 128], strides = [1, 1]} : vector<16x256xf32> to vector<16x128xf32>
    %c6_i32 = arith.constant 6 : i32
    %153 = arith.index_cast %c6_i32 : i32 to index
    %c0_56 = arith.constant 0 : index
    %c0_57 = arith.constant 0 : index
    %154 = vector.load %arg2[%153, %c0_56, %c0_57] : memref<8x16x128xbf16, #tpu.memory_space<vmem>>, vector<1x16x128xbf16>
    %155 = vector.shape_cast %154 : vector<1x16x128xbf16> to vector<16x128xbf16>
    %cst_58 = arith.constant dense<0.000000e+00> : vector<16x256xf32>
    %156 = tpu.matmul %155, %3, %cst_58 {dimension_numbers = #tpu.dot_dimension_numbers<[1], [0], [0], [1], [0, 0, 1, 1], [], []>} : vector<16x128xbf16>, vector<128x256xbf16>, vector<16x256xf32> -> vector<16x256xf32>
    %157 = arith.truncf %152 : vector<16x128xf32> to vector<16x128xbf16>
    %cst_59 = arith.constant dense<0.000000e+00> : vector<16x256xf32>
    %158 = tpu.matmul %157, %4, %cst_59 {dimension_numbers = #tpu.dot_dimension_numbers<[1], [0], [0], [1], [0, 0, 1, 1], [], []>} : vector<16x128xbf16>, vector<128x256xbf16>, vector<16x256xf32> -> vector<16x256xf32>
    %159 = arith.addf %156, %158 : vector<16x256xf32>
    %160 = arith.addf %159, %7 : vector<16x256xf32>
    %161 = vector.extract_strided_slice %160 {offsets = [0, 128], sizes = [16, 128], strides = [1, 1]} : vector<16x256xf32> to vector<16x128xf32>
    %cst_60 = arith.constant dense<0xFF800000> : vector<16xf32>
    %162 = vector.multi_reduction <maximumf>, %161, %cst_60 [1] : vector<16x128xf32> to vector<16xf32>
    %163 = vector.shape_cast %162 : vector<16xf32> to vector<16x1xf32>
    %164 = vector.broadcast %163 : vector<16x1xf32> to vector<16x128xf32>
    %165 = arith.subf %161, %164 : vector<16x128xf32>
    %166 = math.exp %165 : vector<16x128xf32>
    %cst_61 = arith.constant dense<0.000000e+00> : vector<16xf32>
    %167 = vector.multi_reduction <add>, %166, %cst_61 [1] : vector<16x128xf32> to vector<16xf32>
    %168 = vector.shape_cast %167 : vector<16xf32> to vector<16x1xf32>
    %169 = math.log %168 : vector<16x1xf32>
    %170 = vector.broadcast %169 : vector<16x1xf32> to vector<16x128xf32>
    %171 = arith.subf %165, %170 : vector<16x128xf32>
    %172 = arith.index_cast %c6_i32 : i32 to index
    %c0_62 = arith.constant 0 : index
    %c0_63 = arith.constant 0 : index
    %173 = vector.load %arg7[%172, %c0_62, %c0_63] : memref<8x16x128xf32, #tpu.memory_space<vmem>>, vector<1x16x128xf32>
    %174 = vector.shape_cast %173 : vector<1x16x128xf32> to vector<16x128xf32>
    %175 = vector.shape_cast %171 : vector<16x128xf32> to vector<1x16x128xf32>
    tpu.vector_store %arg7[%172, %c0_62, %c0_63], %175 {strides = array<i32>} : memref<8x16x128xf32, #tpu.memory_space<vmem>>, vector<1x16x128xf32>,
    %176 = vector.extract_strided_slice %160 {offsets = [0, 0], sizes = [16, 128], strides = [1, 1]} : vector<16x256xf32> to vector<16x128xf32>
    %c7_i32 = arith.constant 7 : i32
    %177 = arith.index_cast %c7_i32 : i32 to index
    %c0_64 = arith.constant 0 : index
    %c0_65 = arith.constant 0 : index
    %178 = vector.load %arg2[%177, %c0_64, %c0_65] : memref<8x16x128xbf16, #tpu.memory_space<vmem>>, vector<1x16x128xbf16>
    %179 = vector.shape_cast %178 : vector<1x16x128xbf16> to vector<16x128xbf16>
    %cst_66 = arith.constant dense<0.000000e+00> : vector<16x256xf32>
    %180 = tpu.matmul %179, %3, %cst_66 {dimension_numbers = #tpu.dot_dimension_numbers<[1], [0], [0], [1], [0, 0, 1, 1], [], []>} : vector<16x128xbf16>, vector<128x256xbf16>, vector<16x256xf32> -> vector<16x256xf32>
    %181 = arith.truncf %176 : vector<16x128xf32> to vector<16x128xbf16>
    %cst_67 = arith.constant dense<0.000000e+00> : vector<16x256xf32>
    %182 = tpu.matmul %181, %4, %cst_67 {dimension_numbers = #tpu.dot_dimension_numbers<[1], [0], [0], [1], [0, 0, 1, 1], [], []>} : vector<16x128xbf16>, vector<128x256xbf16>, vector<16x256xf32> -> vector<16x256xf32>
    %183 = arith.addf %180, %182 : vector<16x256xf32>
    %184 = arith.addf %183, %7 : vector<16x256xf32>
    %185 = vector.extract_strided_slice %184 {offsets = [0, 128], sizes = [16, 128], strides = [1, 1]} : vector<16x256xf32> to vector<16x128xf32>
    %cst_68 = arith.constant dense<0xFF800000> : vector<16xf32>
    %186 = vector.multi_reduction <maximumf>, %185, %cst_68 [1] : vector<16x128xf32> to vector<16xf32>
    %187 = vector.shape_cast %186 : vector<16xf32> to vector<16x1xf32>
    %188 = vector.broadcast %187 : vector<16x1xf32> to vector<16x128xf32>
    %189 = arith.subf %185, %188 : vector<16x128xf32>
    %190 = math.exp %189 : vector<16x128xf32>
    %cst_69 = arith.constant dense<0.000000e+00> : vector<16xf32>
    %191 = vector.multi_reduction <add>, %190, %cst_69 [1] : vector<16x128xf32> to vector<16xf32>
    %192 = vector.shape_cast %191 : vector<16xf32> to vector<16x1xf32>
    %193 = math.log %192 : vector<16x1xf32>
    %194 = vector.broadcast %193 : vector<16x1xf32> to vector<16x128xf32>
    %195 = arith.subf %189, %194 : vector<16x128xf32>
    %196 = arith.index_cast %c7_i32 : i32 to index
    %c0_70 = arith.constant 0 : index
    %c0_71 = arith.constant 0 : index
    %197 = vector.load %arg7[%196, %c0_70, %c0_71] : memref<8x16x128xf32, #tpu.memory_space<vmem>>, vector<1x16x128xf32>
    %198 = vector.shape_cast %197 : vector<1x16x128xf32> to vector<16x128xf32>
    %199 = vector.shape_cast %195 : vector<16x128xf32> to vector<1x16x128xf32>
    tpu.vector_store %arg7[%196, %c0_70, %c0_71], %199 {strides = array<i32>} : memref<8x16x128xf32, #tpu.memory_space<vmem>>, vector<1x16x128xf32>,
    %200 = vector.extract_strided_slice %184 {offsets = [0, 0], sizes = [16, 128], strides = [1, 1]} : vector<16x256xf32> to vector<16x128xf32>
    %c8_i32 = arith.constant 8 : i32
    %c0_72 = arith.constant 0 : index
    %c0_73 = arith.constant 0 : index
    %201 = vector.load %arg8[%c0_72, %c0_73] : memref<16x128xf32, #tpu.memory_space<vmem>>, vector<16x128xf32>
    tpu.vector_store %arg8[%c0_72, %c0_73], %200 {strides = array<i32>} : memref<16x128xf32, #tpu.memory_space<vmem>>, vector<16x128xf32>,
    return
  }
  func.func @transform_0(%arg0: i32, %arg1: i32) -> (i32, i32, i32) {
    %c0_i32 = arith.constant 0 : i32
    %c0_i32_0 = arith.constant 0 : i32
    return %arg1, %arg0, %c0_i32 : i32, i32, i32
  }
  func.func @transform_1(%arg0: i32, %arg1: i32) -> (i32, i32) {
    %c0_i32 = arith.constant 0 : i32
    %c0_i32_0 = arith.constant 0 : i32
    return %arg0, %c0_i32 : i32, i32
  }
  func.func @transform_2(%arg0: i32, %arg1: i32) -> (i32, i32) {
    %c0_i32 = arith.constant 0 : i32
    %c0_i32_0 = arith.constant 0 : i32
    %c0_i32_1 = arith.constant 0 : i32
    return %c0_i32, %c0_i32_0 : i32, i32
  }
  func.func @transform_3(%arg0: i32, %arg1: i32) -> (i32, i32) {
    %c0_i32 = arith.constant 0 : i32
    %c0_i32_0 = arith.constant 0 : i32
    %c0_i32_1 = arith.constant 0 : i32
    return %c0_i32, %c0_i32_0 : i32, i32
  }
  func.func @transform_4(%arg0: i32, %arg1: i32) -> (i32, i32) {
    %c0_i32 = arith.constant 0 : i32
    %c0_i32_0 = arith.constant 0 : i32
    %c0_i32_1 = arith.constant 0 : i32
    return %c0_i32, %c0_i32_0 : i32, i32
  }
  func.func @transform_5(%arg0: i32, %arg1: i32) -> (i32, i32, i32) {
    %c0_i32 = arith.constant 0 : i32
    %c0_i32_0 = arith.constant 0 : i32
    return %arg1, %arg0, %c0_i32 : i32, i32, i32
  }
  func.func @transform_6(%arg0: i32, %arg1: i32) -> (i32, i32) {
    %c0_i32 = arith.constant 0 : i32
    %c0_i32_0 = arith.constant 0 : i32
    return %arg0, %c0_i32 : i32, i32
  }
}

</mosaic_0001>

<llo_original>
// kernel: rnn_sequence.1
$region0: #{rnn_sequence.1}
  #allocation0 [shape = 'u32[]', space=smem, size = 0x4, offset = 0x4, fixed_abs, tag = 'smem constant byte address 0x4 - core index']
  #allocation1 [shape = 'u32[144,128]{1,0:T(1,128)}', space=vmem, size = 0x12000, scoped, tag = 'internal scratch']
  %s0 = inlined_call_operand.vmem [shape: bf16[8,16,128], index: 0, kind: input, shape index: {}]
  %s1 = inlined_call_operand.vmem [shape: f32[16,128], index: 1, kind: input, shape index: {}]
  %s2 = inlined_call_operand.vmem [shape: bf16[128,256], index: 2, kind: input, shape index: {}]
  %s3 = inlined_call_operand.vmem [shape: bf16[128,256], index: 3, kind: input, shape index: {}]
  %s4 = inlined_call_operand.vmem [shape: f32[1,256], index: 4, kind: input, shape index: {}]
  %s5 = inlined_call_operand.vmem [shape: f32[8,16,128], index: 5, kind: output, shape index: {0}]
  %s6 = inlined_call_operand.vmem [shape: f32[16,128], index: 6, kind: output, shape index: {1}]
  %7 = xla_tuple %s5, %s6
  %s8 = sld [smem:[#allocation0]]
  $region42: #{rnn_sequence.1} parent=0
    _
  %s10 = ssub.s32 1, %s8
  %s11 = scalar_select 0, %s10, %s8
  // Predicated region
  $region2: #{rnn_sequence.1} parent=0 // pred_check
    _
  $region3: #{rnn_sequence.1} parent=0 // pred_check_branch
    %13 = sbr.rel (0) target = $region5
  $region4: #{rnn_sequence.1} parent=0 // pred_region
    _
  $region5: #{rnn_sequence.1} parent=0 // pred_fallthru
    _
  // Predicated region
  $region6: #{rnn_sequence.1} parent=0 // pred_check
    _
  $region7: #{rnn_sequence.1} parent=0 // pred_check_branch
    %15 = sbr.rel (0) target = $region9
  $region8: #{rnn_sequence.1} parent=0 // pred_region
    _
  $region9: #{rnn_sequence.1} parent=0 // pred_fallthru
    _
  // Predicated region
  $region10: #{rnn_sequence.1} parent=0 // pred_check
    _
  $region11: #{rnn_sequence.1} parent=0 // pred_check_branch
    %17 = sbr.rel (0) target = $region13
  $region12: #{rnn_sequence.1} parent=0 // pred_region
    _
  $region13: #{rnn_sequence.1} parent=0 // pred_fallthru
    _
  // Predicated region
  $region14: #{rnn_sequence.1} parent=0 // pred_check
    _
  $region15: #{rnn_sequence.1} parent=0 // pred_check_branch
    %19 = sbr.rel (0) target = $region17
  $region16: #{rnn_sequence.1} parent=0 // pred_region
    _
  $region17: #{rnn_sequence.1} parent=0 // pred_fallthru
    _
  // Predicated region
  $region18: #{rnn_sequence.1} parent=0 // pred_check
    _
  $region19: #{rnn_sequence.1} parent=0 // pred_check_branch
    %21 = sbr.rel (0) target = $region21
  $region20: #{rnn_sequence.1} parent=0 // pred_region
    _
  $region21: #{rnn_sequence.1} parent=0 // pred_fallthru
    _
  %p23 = scmp.eq.s32.totalorder 0, 0
  // Predicated region
  $region22: #{rnn_sequence.1} parent=0 // pred_check
    %p24 = pneg %p23
  $region23: #{rnn_sequence.1} parent=0 // pred_check_branch
    %26 = sbr.rel (%p24) target = $region25
  $region24: #{rnn_sequence.1} parent=0 // pred_region
    %v27 = vld [vmem:[%s1] sm:$0xff]
    %v28 = vld [vmem:[%s1 + $0x8] sm:$0xff]
    %29 = vst [vmem:[%s6] sm:$0xff] %v27
    %30 = vst [vmem:[%s6 + $0x8] sm:$0xff] %v28
  $region25: #{rnn_sequence.1} parent=0 // pred_fallthru
    _
  %v31 = vld [vmem:[%s2] sm:$0xff]
  %v32 = vld [vmem:[%s2 + $0x8] sm:$0xff]
  %v33 = vld [vmem:[%s2 + $0x10] sm:$0xff]
  %v34 = vld [vmem:[%s2 + $0x18] sm:$0xff]
  %v35 = vld [vmem:[%s2 + $0x20] sm:$0xff]
  %v36 = vld [vmem:[%s2 + $0x28] sm:$0xff]
  %v37 = vld [vmem:[%s2 + $0x30] sm:$0xff]
  %v38 = vld [vmem:[%s2 + $0x38] sm:$0xff]
  %v39 = vld [vmem:[%s2 + $0x40] sm:$0xff]
  %v40 = vld [vmem:[%s2 + $0x48] sm:$0xff]
  %v41 = vld [vmem:[%s2 + $0x50] sm:$0xff]
  %v42 = vld [vmem:[%s2 + $0x58] sm:$0xff]
  %v43 = vld [vmem:[%s2 + $0x60] sm:$0xff]
  %v44 = vld [vmem:[%s2 + $0x68] sm:$0xff]
  %v45 = vld [vmem:[%s2 + $0x70] sm:$0xff]
  %v46 = vld [vmem:[%s2 + $0x78] sm:$0xff]
  %v47 = vld [vmem:[%s3] sm:$0xff]
  %v48 = vld [vmem:[%s3 + $0x8] sm:$0xff]
  %v49 = vld [vmem:[%s3 + $0x10] sm:$0xff]
  %v50 = vld [vmem:[%s3 + $0x18] sm:$0xff]
  %v51 = vld [vmem:[%s3 + $0x20] sm:$0xff]
  %v52 = vld [vmem:[%s3 + $0x28] sm:$0xff]
  %v53 = vld [vmem:[%s3 + $0x30] sm:$0xff]
  %v54 = vld [vmem:[%s3 + $0x38] sm:$0xff]
  %v55 = vld [vmem:[%s3 + $0x40] sm:$0xff]
  %v56 = vld [vmem:[%s3 + $0x48] sm:$0xff]
  %v57 = vld [vmem:[%s3 + $0x50] sm:$0xff]
  %v58 = vld [vmem:[%s3 + $0x58] sm:$0xff]
  %v59 = vld [vmem:[%s3 + $0x60] sm:$0xff]
  %v60 = vld [vmem:[%s3 + $0x68] sm:$0xff]
  %v61 = vld [vmem:[%s3 + $0x70] sm:$0xff]
  %v62 = vld [vmem:[%s3 + $0x78] sm:$0xff]
  %v63 = vld [vmem:[%s4] sm:$0x3]
  %v65 = vlaneseq
  %v66 = vshrl.u32 %v65, 7
  %v67 = vsub.s32 0, %v66
  %v68 = vrot.slane %v63, %v67
  %v69 = vlaneseq
  %v70 = vshrl.u32 %v69, 7
  %v71 = vsub.s32 1, %v70
  %v72 = vrot.slane %v63, %v71
  %v75 = vld [vmem:[%s6] sm:$0xff]
  %v76 = vld [vmem:[%s6 + $0x8] sm:$0xff]
  %v77 = vld [vmem:[%s0] sm:$0xf]
  %v78 = vld [vmem:[%s0 + $0x4] sm:$0xf]
  %v79 = vpack.c.bf16 %v76, %v75
  %v96 = vunpack.c.l.b16 %v47
  %v97 = vunpack.c.h.b16 %v47
  %v98 = vunpack.c.l.b16 %v48
  %v99 = vunpack.c.h.b16 %v48
  %v100 = vunpack.c.l.b16 %v49
  %v101 = vunpack.c.h.b16 %v49
  %v102 = vunpack.c.l.b16 %v50
  %v103 = vunpack.c.h.b16 %v50
  %v104 = vunpack.c.l.b16 %v51
  %v105 = vunpack.c.h.b16 %v51
  %v106 = vunpack.c.l.b16 %v52
  %v107 = vunpack.c.h.b16 %v52
  %v108 = vunpack.c.l.b16 %v53
  %v109 = vunpack.c.h.b16 %v53
  %v110 = vunpack.c.l.b16 %v54
  %v111 = vunpack.c.h.b16 %v54
  %v112 = vunpack.c.l.b16 %v55
  %v113 = vunpack.c.h.b16 %v55
  %v114 = vunpack.c.l.b16 %v56
  %v115 = vunpack.c.h.b16 %v56
  %v116 = vunpack.c.l.b16 %v57
  %v117 = vunpack.c.h.b16 %v57
  %v118 = vunpack.c.l.b16 %v58
  %v119 = vunpack.c.h.b16 %v58
  %v120 = vunpack.c.l.b16 %v59
  %v121 = vunpack.c.h.b16 %v59
  %v122 = vunpack.c.l.b16 %v60
  %v123 = vunpack.c.h.b16 %v60
  %v124 = vunpack.c.l.b16 %v61
  %v125 = vunpack.c.h.b16 %v61
  %v126 = vunpack.c.l.b16 %v62
  %v127 = vunpack.c.h.b16 %v62
  %v128 = vpack.c.b16 %v98, %v96
  %v129 = vpack.c.b16 %v99, %v97
  %v130 = vpack.c.b16 %v102, %v100
  %v131 = vpack.c.b16 %v103, %v101
  %v132 = vpack.c.b16 %v106, %v104
  %v133 = vpack.c.b16 %v107, %v105
  %v134 = vpack.c.b16 %v110, %v108
  %v135 = vpack.c.b16 %v111, %v109
  %v136 = vpack.c.b16 %v114, %v112
  %v137 = vpack.c.b16 %v115, %v113
  %v138 = vpack.c.b16 %v118, %v116
  %v139 = vpack.c.b16 %v119, %v117
  %v140 = vpack.c.b16 %v122, %v120
  %v141 = vpack.c.b16 %v123, %v121
  %v142 = vpack.c.b16 %v126, %v124
  %v143 = vpack.c.b16 %v127, %v125
  %160 = vmatprep.subr.bf16.mxu0 %v129
  %161 = vmatpush1.bf16.msra.mxu0 %v128
  %162 = vmatprep.subr.bf16.mxu0 %v131
  %163 = vmatpush1.bf16.msra.mxu0 %v130
  %164 = vmatprep.subr.bf16.mxu0 %v133
  %165 = vmatpush1.bf16.msra.mxu0 %v132
  %166 = vmatprep.subr.bf16.mxu0 %v135
  %167 = vmatpush1.bf16.msra.mxu0 %v134
  %168 = vmatprep.subr.bf16.mxu0 %v137
  %169 = vmatpush1.bf16.msra.mxu0 %v136
  %170 = vmatprep.subr.bf16.mxu0 %v139
  %171 = vmatpush1.bf16.msra.mxu0 %v138
  %172 = vmatprep.subr.bf16.mxu0 %v141
  %173 = vmatpush1.bf16.msra.mxu0 %v140
  %174 = vmatprep.subr.bf16.mxu0 %v143
  %175 = vmatpush1.bf16.msra.mxu0 %v142
  %176 = vmatprep.subr.bf16.mxu0 0
  %177 = vmatpush1.bf16.msra.mxu0 0
  %178 = vmatprep.subr.bf16.mxu0 0
  %179 = vmatpush1.bf16.msra.mxu0 0
  %180 = vmatprep.subr.bf16.mxu0 0
  %181 = vmatpush1.bf16.msra.mxu0 0
  %182 = vmatprep.subr.bf16.mxu0 0
  %183 = vmatpush1.bf16.msra.mxu0 0
  %184 = vmatprep.subr.bf16.mxu0 0
  %185 = vmatpush1.bf16.msra.mxu0 0
  %186 = vmatprep.subr.bf16.mxu0 0
  %187 = vmatpush1.bf16.msra.mxu0 0
  %188 = vmatprep.subr.bf16.mxu0 0
  %189 = vmatpush1.bf16.msra.mxu0 0
  %190 = vmatprep.subr.bf16.mxu0 0
  %191 = vmatpush1.bf16.msra.mxu0 0
  %192 = vmatprep.mubr.bf16.mxu0 0
  %193 = vmatmul.mubr.bf16.gmra.mrb[0].mxu0 %v79
  %v194 = vpop.f32.mrb[0].mxu0
  %v195 = vadd.f32 0.0, %v194
  %v196 = vpop.f32.mrb[0].mxu0
  %v197 = vadd.f32 0.0, %v196
  %v198 = vpop.f32.mrb[0].mxu0
  %v199 = vadd.f32 0.0, %v198
  %v200 = vpop.f32.mrb[0].mxu0
  %v201 = vadd.f32 0.0, %v200
  %202 = vdwg.mxu0
  %v205 = vunpack.c.l.b16 %v77
  %v206 = vunpack.c.l.b16 %v78
  %v207 = vpack.c.b16 %v206, %v205
  %v225 = vunpack.c.l.b16 %v31
  %v226 = vunpack.c.h.b16 %v31
  %v227 = vunpack.c.l.b16 %v32
  %v228 = vunpack.c.h.b16 %v32
  %v229 = vunpack.c.l.b16 %v33
  %v230 = vunpack.c.h.b16 %v33
  %v231 = vunpack.c.l.b16 %v34
  %v232 = vunpack.c.h.b16 %v34
  %v233 = vunpack.c.l.b16 %v35
  %v234 = vunpack.c.h.b16 %v35
  %v235 = vunpack.c.l.b16 %v36
  %v236 = vunpack.c.h.b16 %v36
  %v237 = vunpack.c.l.b16 %v37
  %v238 = vunpack.c.h.b16 %v37
  %v239 = vunpack.c.l.b16 %v38
  %v240 = vunpack.c.h.b16 %v38
  %v241 = vunpack.c.l.b16 %v39
  %v242 = vunpack.c.h.b16 %v39
  %v243 = vunpack.c.l.b16 %v40
  %v244 = vunpack.c.h.b16 %v40
  %v245 = vunpack.c.l.b16 %v41
  %v246 = vunpack.c.h.b16 %v41
  %v247 = vunpack.c.l.b16 %v42
  %v248 = vunpack.c.h.b16 %v42
  %v249 = vunpack.c.l.b16 %v43
  %v250 = vunpack.c.h.b16 %v43
  %v251 = vunpack.c.l.b16 %v44
  %v252 = vunpack.c.h.b16 %v44
  %v253 = vunpack.c.l.b16 %v45
  %v254 = vunpack.c.h.b16 %v45
  %v255 = vunpack.c.l.b16 %v46
  %v256 = vunpack.c.h.b16 %v46
  %v257 = vpack.c.b16 %v227, %v225
  %v258 = vpack.c.b16 %v228, %v226
  %v259 = vpack.c.b16 %v231, %v229
  %v260 = vpack.c.b16 %v232, %v230
  %v261 = vpack.c.b16 %v235, %v233
  %v262 = vpack.c.b16 %v236, %v234
  %v263 = vpack.c.b16 %v239, %v237
  %v264 = vpack.c.b16 %v240, %v238
  %v265 = vpack.c.b16 %v243, %v241
  %v266 = vpack.c.b16 %v244, %v242
  %v267 = vpack.c.b16 %v247, %v245
  %v268 = vpack.c.b16 %v248, %v246
  %v269 = vpack.c.b16 %v251, %v249
  %v270 = vpack.c.b16 %v252, %v250
  %v271 = vpack.c.b16 %v255, %v253
  %v272 = vpack.c.b16 %v256, %v254
  %289 = vmatprep.subr.bf16.mxu0 %v258
  %290 = vmatpush1.bf16.msra.mxu0 %v257
  %291 = vmatprep.subr.bf16.mxu0 %v260
  %292 = vmatpush1.bf16.msra.mxu0 %v259
  %293 = vmatprep.subr.bf16.mxu0 %v262
  %294 = vmatpush1.bf16.msra.mxu0 %v261
  %295 = vmatprep.subr.bf16.mxu0 %v264
  %296 = vmatpush1.bf16.msra.mxu0 %v263
  %297 = vmatprep.subr.bf16.mxu0 %v266
  %298 = vmatpush1.bf16.msra.mxu0 %v265
  %299 = vmatprep.subr.bf16.mxu0 %v268
  %300 = vmatpush1.bf16.msra.mxu0 %v267
  %301 = vmatprep.subr.bf16.mxu0 %v270
  %302 = vmatpush1.bf16.msra.mxu0 %v269
  %303 = vmatprep.subr.bf16.mxu0 %v272
  %304 = vmatpush1.bf16.msra.mxu0 %v271
  %305 = vmatprep.subr.bf16.mxu0 0
  %306 = vmatpush1.bf16.msra.mxu0 0
  %307 = vmatprep.subr.bf16.mxu0 0
  %308 = vmatpush1.bf16.msra.mxu0 0
  %309 = vmatprep.subr.bf16.mxu0 0
  %310 = vmatpush1.bf16.msra.mxu0 0
  %311 = vmatprep.subr.bf16.mxu0 0
  %312 = vmatpush1.bf16.msra.mxu0 0
  %313 = vmatprep.subr.bf16.mxu0 0
  %314 = vmatpush1.bf16.msra.mxu0 0
  %315 = vmatprep.subr.bf16.mxu0 0
  %316 = vmatpush1.bf16.msra.mxu0 0
  %317 = vmatprep.subr.bf16.mxu0 0
  %318 = vmatpush1.bf16.msra.mxu0 0
  %319 = vmatprep.subr.bf16.mxu0 0
  %320 = vmatpush1.bf16.msra.mxu0 0
  %321 = vmatprep.mubr.bf16.mxu0 0
  %322 = vmatmul.mubr.bf16.gmra.mrb[0].mxu0 %v207
  %v323 = vpop.f32.mrb[0].mxu0
  %v324 = vadd.f32 %v195, %v323
  %v325 = vpop.f32.mrb[0].mxu0
  %v326 = vadd.f32 %v197, %v325
  %v327 = vpop.f32.mrb[0].mxu0
  %v328 = vadd.f32 %v199, %v327
  %v329 = vpop.f32.mrb[0].mxu0
  %v330 = vadd.f32 %v201, %v329
  %331 = vdwg.mxu0
  %v332 = vadd.f32 %v324, %v68
  %v333 = vadd.f32 %v326, %v72
  %v334 = vadd.f32 %v328, %v68
  %v335 = vadd.f32 %v330, %v72
  %336 = vmax.xlane.f32.xlu0 %v333
  %v337 = vpop.xlane.xlu0 %336
  %338 = vmax.xlane.f32.xlu0 %v335
  %v339 = vpop.xlane.xlu0 %338
  %v340 = vsub.f32 %v333, %v337
  %v341 = vsub.f32 %v335, %v339
  %v342 = vmul.f32 %v340, 1.442695
  %v343 = vpow.pop %v342
  %v344 = vmul.f32 %v341, 1.442695
  %v345 = vpow.pop %v344
  %346 = vadd.xlane.f32.xlu0 %v343
  %v347 = vpop.xlane.xlu0 %346
  %348 = vadd.xlane.f32.xlu0 %v345
  %v349 = vpop.xlane.xlu0 %348
  %v350 = vlog2.pop %v347
  %v351 = vmul.f32 %v350, 0.6931472
  %v352 = vlog2.pop %v349
  %v353 = vmul.f32 %v352, 0.6931472
  %v354 = vsub.f32 %v340, %v351
  %v355 = vsub.f32 %v341, %v353
  %356 = vst [vmem:[%s5] sm:$0xff] %v354
  %357 = vst [vmem:[%s5 + $0x8] sm:$0xff] %v355
  %s358 = scalar_lea.vmem %s0, 8
  %v359 = vld [vmem:[%s358] sm:$0xf]
  %v360 = vld [vmem:[%s358 + $0x4] sm:$0xf]
  %v361 = vpack.c.bf16 %v334, %v332
  %362 = vmatprep.subr.bf16.mxu0 %v129
  %363 = vmatpush1.bf16.msra.mxu0 %v128
  %364 = vmatprep.subr.bf16.mxu0 %v131
  %365 = vmatpush1.bf16.msra.mxu0 %v130
  %366 = vmatprep.subr.bf16.mxu0 %v133
  %367 = vmatpush1.bf16.msra.mxu0 %v132
  %368 = vmatprep.subr.bf16.mxu0 %v135
  %369 = vmatpush1.bf16.msra.mxu0 %v134
  %370 = vmatprep.subr.bf16.mxu0 %v137
  %371 = vmatpush1.bf16.msra.mxu0 %v136
  %372 = vmatprep.subr.bf16.mxu0 %v139
  %373 = vmatpush1.bf16.msra.mxu0 %v138
  %374 = vmatprep.subr.bf16.mxu0 %v141
  %375 = vmatpush1.bf16.msra.mxu0 %v140
  %376 = vmatprep.subr.bf16.mxu0 %v143
  %377 = vmatpush1.bf16.msra.mxu0 %v142
  %378 = vmatprep.subr.bf16.mxu0 0
  %379 = vmatpush1.bf16.msra.mxu0 0
  %380 = vmatprep.subr.bf16.mxu0 0
  %381 = vmatpush1.bf16.msra.mxu0 0
  %382 = vmatprep.subr.bf16.mxu0 0
  %383 = vmatpush1.bf16.msra.mxu0 0
  %384 = vmatprep.subr.bf16.mxu0 0
  %385 = vmatpush1.bf16.msra.mxu0 0
  %386 = vmatprep.subr.bf16.mxu0 0
  %387 = vmatpush1.bf16.msra.mxu0 0
  %388 = vmatprep.subr.bf16.mxu0 0
  %389 = vmatpush1.bf16.msra.mxu0 0
  %390 = vmatprep.subr.bf16.mxu0 0
  %391 = vmatpush1.bf16.msra.mxu0 0
  %392 = vmatprep.subr.bf16.mxu0 0
  %393 = vmatpush1.bf16.msra.mxu0 0
  %394 = vmatprep.mubr.bf16.mxu0 0
  %395 = vmatmul.mubr.bf16.gmra.mrb[0].mxu0 %v361
  %v396 = vpop.f32.mrb[0].mxu0
  %v397 = vadd.f32 0.0, %v396
  %v398 = vpop.f32.mrb[0].mxu0
  %v399 = vadd.f32 0.0, %v398
  %v400 = vpop.f32.mrb[0].mxu0
  %v401 = vadd.f32 0.0, %v400
  %v402 = vpop.f32.mrb[0].mxu0
  %v403 = vadd.f32 0.0, %v402
  %404 = vdwg.mxu0
  %v407 = vunpack.c.l.b16 %v359
  %v408 = vunpack.c.l.b16 %v360
  %v409 = vpack.c.b16 %v408, %v407
  %411 = vmatprep.subr.bf16.mxu0 %v258
  %412 = vmatpush1.bf16.msra.mxu0 %v257
  %413 = vmatprep.subr.bf16.mxu0 %v260
  %414 = vmatpush1.bf16.msra.mxu0 %v259
  %415 = vmatprep.subr.bf16.mxu0 %v262
  %416 = vmatpush1.bf16.msra.mxu0 %v261
  %417 = vmatprep.subr.bf16.mxu0 %v264
  %418 = vmatpush1.bf16.msra.mxu0 %v263
  %419 = vmatprep.subr.bf16.mxu0 %v266
  %420 = vmatpush1.bf16.msra.mxu0 %v265
  %421 = vmatprep.subr.bf16.mxu0 %v268
  %422 = vmatpush1.bf16.msra.mxu0 %v267
  %423 = vmatprep.subr.bf16.mxu0 %v270
  %424 = vmatpush1.bf16.msra.mxu0 %v269
  %425 = vmatprep.subr.bf16.mxu0 %v272
  %426 = vmatpush1.bf16.msra.mxu0 %v271
  %427 = vmatprep.subr.bf16.mxu0 0
  %428 = vmatpush1.bf16.msra.mxu0 0
  %429 = vmatprep.subr.bf16.mxu0 0
  %430 = vmatpush1.bf16.msra.mxu0 0
  %431 = vmatprep.subr.bf16.mxu0 0
  %432 = vmatpush1.bf16.msra.mxu0 0
  %433 = vmatprep.subr.bf16.mxu0 0
  %434 = vmatpush1.bf16.msra.mxu0 0
  %435 = vmatprep.subr.bf16.mxu0 0
  %436 = vmatpush1.bf16.msra.mxu0 0
  %437 = vmatprep.subr.bf16.mxu0 0
  %438 = vmatpush1.bf16.msra.mxu0 0
  %439 = vmatprep.subr.bf16.mxu0 0
  %440 = vmatpush1.bf16.msra.mxu0 0
  %441 = vmatprep.subr.bf16.mxu0 0
  %442 = vmatpush1.bf16.msra.mxu0 0
  %443 = vmatprep.mubr.bf16.mxu0 0
  %444 = vmatmul.mubr.bf16.gmra.mrb[0].mxu0 %v409
  %v445 = vpop.f32.mrb[0].mxu0
  %v446 = vadd.f32 %v397, %v445
  %v447 = vpop.f32.mrb[0].mxu0
  %v448 = vadd.f32 %v399, %v447
  %v449 = vpop.f32.mrb[0].mxu0
  %v450 = vadd.f32 %v401, %v449
  %v451 = vpop.f32.mrb[0].mxu0
  %v452 = vadd.f32 %v403, %v451
  %453 = vdwg.mxu0
  %v454 = vadd.f32 %v446, %v68
  %v455 = vadd.f32 %v448, %v72
  %v456 = vadd.f32 %v450, %v68
  %v457 = vadd.f32 %v452, %v72
  %458 = vmax.xlane.f32.xlu0 %v455
  %v459 = vpop.xlane.xlu0 %458
  %460 = vmax.xlane.f32.xlu0 %v457
  %v461 = vpop.xlane.xlu0 %460
  %v462 = vsub.f32 %v455, %v459
  %v463 = vsub.f32 %v457, %v461
  %v464 = vmul.f32 %v462, 1.442695
  %v465 = vpow.pop %v464
  %v466 = vmul.f32 %v463, 1.442695
  %v467 = vpow.pop %v466
  %468 = vadd.xlane.f32.xlu0 %v465
  %v469 = vpop.xlane.xlu0 %468
  %470 = vadd.xlane.f32.xlu0 %v467
  %v471 = vpop.xlane.xlu0 %470
  %v472 = vlog2.pop %v469
  %v473 = vmul.f32 %v472, 0.6931472
  %v474 = vlog2.pop %v471
  %v475 = vmul.f32 %v474, 0.6931472
  %v476 = vsub.f32 %v462, %v473
  %v477 = vsub.f32 %v463, %v475
  %s478 = scalar_lea.vmem %s5, 16
  %479 = vst [vmem:[%s478] sm:$0xff] %v476
  %480 = vst [vmem:[%s478 + $0x8] sm:$0xff] %v477
  %s481 = scalar_lea.vmem %s0, 16
  %v482 = vld [vmem:[%s481] sm:$0xf]
  %v483 = vld [vmem:[%s481 + $0x4] sm:$0xf]
  %v484 = vpack.c.bf16 %v456, %v454
  %485 = vmatprep.subr.bf16.mxu0 %v129
  %486 = vmatpush1.bf16.msra.mxu0 %v128
  %487 = vmatprep.subr.bf16.mxu0 %v131
  %488 = vmatpush1.bf16.msra.mxu0 %v130
  %489 = vmatprep.subr.bf16.mxu0 %v133
  %490 = vmatpush1.bf16.msra.mxu0 %v132
  %491 = vmatprep.subr.bf16.mxu0 %v135
  %492 = vmatpush1.bf16.msra.mxu0 %v134
  %493 = vmatprep.subr.bf16.mxu0 %v137
  %494 = vmatpush1.bf16.msra.mxu0 %v136
  %495 = vmatprep.subr.bf16.mxu0 %v139
  %496 = vmatpush1.bf16.msra.mxu0 %v138
  %497 = vmatprep.subr.bf16.mxu0 %v141
  %498 = vmatpush1.bf16.msra.mxu0 %v140
  %499 = vmatprep.subr.bf16.mxu0 %v143
  %500 = vmatpush1.bf16.msra.mxu0 %v142
  %501 = vmatprep.subr.bf16.mxu0 0
  %502 = vmatpush1.bf16.msra.mxu0 0
  %503 = vmatprep.subr.bf16.mxu0 0
  %504 = vmatpush1.bf16.msra.mxu0 0
  %505 = vmatprep.subr.bf16.mxu0 0
  %506 = vmatpush1.bf16.msra.mxu0 0
  %507 = vmatprep.subr.bf16.mxu0 0
  %508 = vmatpush1.bf16.msra.mxu0 0
  %509 = vmatprep.subr.bf16.mxu0 0
  %510 = vmatpush1.bf16.msra.mxu0 0
  %511 = vmatprep.subr.bf16.mxu0 0
  %512 = vmatpush1.bf16.msra.mxu0 0
  %513 = vmatprep.subr.bf16.mxu0 0
  %514 = vmatpush1.bf16.msra.mxu0 0
  %515 = vmatprep.subr.bf16.mxu0 0
  %516 = vmatpush1.bf16.msra.mxu0 0
  %517 = vmatprep.mubr.bf16.mxu0 0
  %518 = vmatmul.mubr.bf16.gmra.mrb[0].mxu0 %v484
  %v519 = vpop.f32.mrb[0].mxu0
  %v520 = vadd.f32 0.0, %v519
  %v521 = vpop.f32.mrb[0].mxu0
  %v522 = vadd.f32 0.0, %v521
  %v523 = vpop.f32.mrb[0].mxu0
  %v524 = vadd.f32 0.0, %v523
  %v525 = vpop.f32.mrb[0].mxu0
  %v526 = vadd.f32 0.0, %v525
  %527 = vdwg.mxu0
  %v530 = vunpack.c.l.b16 %v482
  %v531 = vunpack.c.l.b16 %v483
  %v532 = vpack.c.b16 %v531, %v530
  %534 = vmatprep.subr.bf16.mxu0 %v258
  %535 = vmatpush1.bf16.msra.mxu0 %v257
  %536 = vmatprep.subr.bf16.mxu0 %v260
  %537 = vmatpush1.bf16.msra.mxu0 %v259
  %538 = vmatprep.subr.bf16.mxu0 %v262
  %539 = vmatpush1.bf16.msra.mxu0 %v261
  %540 = vmatprep.subr.bf16.mxu0 %v264
  %541 = vmatpush1.bf16.msra.mxu0 %v263
  %542 = vmatprep.subr.bf16.mxu0 %v266
  %543 = vmatpush1.bf16.msra.mxu0 %v265
  %544 = vmatprep.subr.bf16.mxu0 %v268
  %545 = vmatpush1.bf16.msra.mxu0 %v267
  %546 = vmatprep.subr.bf16.mxu0 %v270
  %547 = vmatpush1.bf16.msra.mxu0 %v269
  %548 = vmatprep.subr.bf16.mxu0 %v272
  %549 = vmatpush1.bf16.msra.mxu0 %v271
  %550 = vmatprep.subr.bf16.mxu0 0
  %551 = vmatpush1.bf16.msra.mxu0 0
  %552 = vmatprep.subr.bf16.mxu0 0
  %553 = vmatpush1.bf16.msra.mxu0 0
  %554 = vmatprep.subr.bf16.mxu0 0
  %555 = vmatpush1.bf16.msra.mxu0 0
  %556 = vmatprep.subr.bf16.mxu0 0
  %557 = vmatpush1.bf16.msra.mxu0 0
  %558 = vmatprep.subr.bf16.mxu0 0
  %559 = vmatpush1.bf16.msra.mxu0 0
  %560 = vmatprep.subr.bf16.mxu0 0
  %561 = vmatpush1.bf16.msra.mxu0 0
  %562 = vmatprep.subr.bf16.mxu0 0
  %563 = vmatpush1.bf16.msra.mxu0 0
  %564 = vmatprep.subr.bf16.mxu0 0
  %565 = vmatpush1.bf16.msra.mxu0 0
  %566 = vmatprep.mubr.bf16.mxu0 0
  %567 = vmatmul.mubr.bf16.gmra.mrb[0].mxu0 %v532
  %v568 = vpop.f32.mrb[0].mxu0
  %v569 = vadd.f32 %v520, %v568
  %v570 = vpop.f32.mrb[0].mxu0
  %v571 = vadd.f32 %v522, %v570
  %v572 = vpop.f32.mrb[0].mxu0
  %v573 = vadd.f32 %v524, %v572
  %v574 = vpop.f32.mrb[0].mxu0
  %v575 = vadd.f32 %v526, %v574
  %576 = vdwg.mxu0
  %v577 = vadd.f32 %v569, %v68
  %v578 = vadd.f32 %v571, %v72
  %v579 = vadd.f32 %v573, %v68
  %v580 = vadd.f32 %v575, %v72
  %581 = vmax.xlane.f32.xlu0 %v578
  %v582 = vpop.xlane.xlu0 %581
  %583 = vmax.xlane.f32.xlu0 %v580
  %v584 = vpop.xlane.xlu0 %583
  %v585 = vsub.f32 %v578, %v582
  %v586 = vsub.f32 %v580, %v584
  %v587 = vmul.f32 %v585, 1.442695
  %v588 = vpow.pop %v587
  %v589 = vmul.f32 %v586, 1.442695
  %v590 = vpow.pop %v589
  %591 = vadd.xlane.f32.xlu0 %v588
  %v592 = vpop.xlane.xlu0 %591
  %593 = vadd.xlane.f32.xlu0 %v590
  %v594 = vpop.xlane.xlu0 %593
  %v595 = vlog2.pop %v592
  %v596 = vmul.f32 %v595, 0.6931472
  %v597 = vlog2.pop %v594
  %v598 = vmul.f32 %v597, 0.6931472
  %v599 = vsub.f32 %v585, %v596
  %v600 = vsub.f32 %v586, %v598
  %s601 = scalar_lea.vmem %s5, 32
  %602 = vst [vmem:[%s601] sm:$0xff] %v599
  %603 = vst [vmem:[%s601 + $0x8] sm:$0xff] %v600
  %s604 = scalar_lea.vmem %s0, 24
  %v605 = vld [vmem:[%s604] sm:$0xf]
  %v606 = vld [vmem:[%s604 + $0x4] sm:$0xf]
  %v607 = vpack.c.bf16 %v579, %v577
  %608 = vmatprep.subr.bf16.mxu0 %v129
  %609 = vmatpush1.bf16.msra.mxu0 %v128
  %610 = vmatprep.subr.bf16.mxu0 %v131
  %611 = vmatpush1.bf16.msra.mxu0 %v130
  %612 = vmatprep.subr.bf16.mxu0 %v133
  %613 = vmatpush1.bf16.msra.mxu0 %v132
  %614 = vmatprep.subr.bf16.mxu0 %v135
  %615 = vmatpush1.bf16.msra.mxu0 %v134
  %616 = vmatprep.subr.bf16.mxu0 %v137
  %617 = vmatpush1.bf16.msra.mxu0 %v136
  %618 = vmatprep.subr.bf16.mxu0 %v139
  %619 = vmatpush1.bf16.msra.mxu0 %v138
  %620 = vmatprep.subr.bf16.mxu0 %v141
  %621 = vmatpush1.bf16.msra.mxu0 %v140
  %622 = vmatprep.subr.bf16.mxu0 %v143
  %623 = vmatpush1.bf16.msra.mxu0 %v142
  %624 = vmatprep.subr.bf16.mxu0 0
  %625 = vmatpush1.bf16.msra.mxu0 0
  %626 = vmatprep.subr.bf16.mxu0 0
  %627 = vmatpush1.bf16.msra.mxu0 0
  %628 = vmatprep.subr.bf16.mxu0 0
  %629 = vmatpush1.bf16.msra.mxu0 0
  %630 = vmatprep.subr.bf16.mxu0 0
  %631 = vmatpush1.bf16.msra.mxu0 0
  %632 = vmatprep.subr.bf16.mxu0 0
  %633 = vmatpush1.bf16.msra.mxu0 0
  %634 = vmatprep.subr.bf16.mxu0 0
  %635 = vmatpush1.bf16.msra.mxu0 0
  %636 = vmatprep.subr.bf16.mxu0 0
  %637 = vmatpush1.bf16.msra.mxu0 0
  %638 = vmatprep.subr.bf16.mxu0 0
  %639 = vmatpush1.bf16.msra.mxu0 0
  %640 = vmatprep.mubr.bf16.mxu0 0
  %641 = vmatmul.mubr.bf16.gmra.mrb[0].mxu0 %v607
  %v642 = vpop.f32.mrb[0].mxu0
  %v643 = vadd.f32 0.0, %v642
  %v644 = vpop.f32.mrb[0].mxu0
  %v645 = vadd.f32 0.0, %v644
  %v646 = vpop.f32.mrb[0].mxu0
  %v647 = vadd.f32 0.0, %v646
  %v648 = vpop.f32.mrb[0].mxu0
  %v649 = vadd.f32 0.0, %v648
  %650 = vdwg.mxu0
  %v653 = vunpack.c.l.b16 %v605
  %v654 = vunpack.c.l.b16 %v606
  %v655 = vpack.c.b16 %v654, %v653
  %657 = vmatprep.subr.bf16.mxu0 %v258
  %658 = vmatpush1.bf16.msra.mxu0 %v257
  %659 = vmatprep.subr.bf16.mxu0 %v260
  %660 = vmatpush1.bf16.msra.mxu0 %v259
  %661 = vmatprep.subr.bf16.mxu0 %v262
  %662 = vmatpush1.bf16.msra.mxu0 %v261
  %663 = vmatprep.subr.bf16.mxu0 %v264
  %664 = vmatpush1.bf16.msra.mxu0 %v263
  %665 = vmatprep.subr.bf16.mxu0 %v266
  %666 = vmatpush1.bf16.msra.mxu0 %v265
  %667 = vmatprep.subr.bf16.mxu0 %v268
  %668 = vmatpush1.bf16.msra.mxu0 %v267
  %669 = vmatprep.subr.bf16.mxu0 %v270
  %670 = vmatpush1.bf16.msra.mxu0 %v269
  %671 = vmatprep.subr.bf16.mxu0 %v272
  %672 = vmatpush1.bf16.msra.mxu0 %v271
  %673 = vmatprep.subr.bf16.mxu0 0
  %674 = vmatpush1.bf16.msra.mxu0 0
  %675 = vmatprep.subr.bf16.mxu0 0
  %676 = vmatpush1.bf16.msra.mxu0 0
  %677 = vmatprep.subr.bf16.mxu0 0
  %678 = vmatpush1.bf16.msra.mxu0 0
  %679 = vmatprep.subr.bf16.mxu0 0
  %680 = vmatpush1.bf16.msra.mxu0 0
  %681 = vmatprep.subr.bf16.mxu0 0
  %682 = vmatpush1.bf16.msra.mxu0 0
  %683 = vmatprep.subr.bf16.mxu0 0
  %684 = vmatpush1.bf16.msra.mxu0 0
  %685 = vmatprep.subr.bf16.mxu0 0
  %686 = vmatpush1.bf16.msra.mxu0 0
  %687 = vmatprep.subr.bf16.mxu0 0
  %688 = vmatpush1.bf16.msra.mxu0 0
  %689 = vmatprep.mubr.bf16.mxu0 0
  %690 = vmatmul.mubr.bf16.gmra.mrb[0].mxu0 %v655
  %v691 = vpop.f32.mrb[0].mxu0
  %v692 = vadd.f32 %v643, %v691
  %v693 = vpop.f32.mrb[0].mxu0
  %v694 = vadd.f32 %v645, %v693
  %v695 = vpop.f32.mrb[0].mxu0
  %v696 = vadd.f32 %v647, %v695
  %v697 = vpop.f32.mrb[0].mxu0
  %v698 = vadd.f32 %v649, %v697
  %699 = vdwg.mxu0
  %v700 = vadd.f32 %v692, %v68
  %v701 = vadd.f32 %v694, %v72
  %v702 = vadd.f32 %v696, %v68
  %v703 = vadd.f32 %v698, %v72
  %704 = vmax.xlane.f32.xlu0 %v701
  %v705 = vpop.xlane.xlu0 %704
  %706 = vmax.xlane.f32.xlu0 %v703
  %v707 = vpop.xlane.xlu0 %706
  %v708 = vsub.f32 %v701, %v705
  %v709 = vsub.f32 %v703, %v707
  %v710 = vmul.f32 %v708, 1.442695
  %v711 = vpow.pop %v710
  %v712 = vmul.f32 %v709, 1.442695
  %v713 = vpow.pop %v712
  %714 = vadd.xlane.f32.xlu0 %v711
  %v715 = vpop.xlane.xlu0 %714
  %716 = vadd.xlane.f32.xlu0 %v713
  %v717 = vpop.xlane.xlu0 %716
  %v718 = vlog2.pop %v715
  %v719 = vmul.f32 %v718, 0.6931472
  %v720 = vlog2.pop %v717
  %v721 = vmul.f32 %v720, 0.6931472
  %v722 = vsub.f32 %v708, %v719
  %v723 = vsub.f32 %v709, %v721
  %s724 = scalar_lea.vmem %s5, 48
  %725 = vst [vmem:[%s724] sm:$0xff] %v722
  %726 = vst [vmem:[%s724 + $0x8] sm:$0xff] %v723
  %s727 = scalar_lea.vmem %s0, 32
  %v728 = vld [vmem:[%s727] sm:$0xf]
  %v729 = vld [vmem:[%s727 + $0x4] sm:$0xf]
  %v730 = vpack.c.bf16 %v702, %v700
  %731 = vmatprep.subr.bf16.mxu0 %v129
  %732 = vmatpush1.bf16.msra.mxu0 %v128
  %733 = vmatprep.subr.bf16.mxu0 %v131
  %734 = vmatpush1.bf16.msra.mxu0 %v130
  %735 = vmatprep.subr.bf16.mxu0 %v133
  %736 = vmatpush1.bf16.msra.mxu0 %v132
  %737 = vmatprep.subr.bf16.mxu0 %v135
  %738 = vmatpush1.bf16.msra.mxu0 %v134
  %739 = vmatprep.subr.bf16.mxu0 %v137
  %740 = vmatpush1.bf16.msra.mxu0 %v136
  %741 = vmatprep.subr.bf16.mxu0 %v139
  %742 = vmatpush1.bf16.msra.mxu0 %v138
  %743 = vmatprep.subr.bf16.mxu0 %v141
  %744 = vmatpush1.bf16.msra.mxu0 %v140
  %745 = vmatprep.subr.bf16.mxu0 %v143
  %746 = vmatpush1.bf16.msra.mxu0 %v142
  %747 = vmatprep.subr.bf16.mxu0 0
  %748 = vmatpush1.bf16.msra.mxu0 0
  %749 = vmatprep.subr.bf16.mxu0 0
  %750 = vmatpush1.bf16.msra.mxu0 0
  %751 = vmatprep.subr.bf16.mxu0 0
  %752 = vmatpush1.bf16.msra.mxu0 0
  %753 = vmatprep.subr.bf16.mxu0 0
  %754 = vmatpush1.bf16.msra.mxu0 0
  %755 = vmatprep.subr.bf16.mxu0 0
  %756 = vmatpush1.bf16.msra.mxu0 0
  %757 = vmatprep.subr.bf16.mxu0 0
  %758 = vmatpush1.bf16.msra.mxu0 0
  %759 = vmatprep.subr.bf16.mxu0 0
  %760 = vmatpush1.bf16.msra.mxu0 0
  %761 = vmatprep.subr.bf16.mxu0 0
  %762 = vmatpush1.bf16.msra.mxu0 0
  %763 = vmatprep.mubr.bf16.mxu0 0
  %764 = vmatmul.mubr.bf16.gmra.mrb[0].mxu0 %v730
  %v765 = vpop.f32.mrb[0].mxu0
  %v766 = vadd.f32 0.0, %v765
  %v767 = vpop.f32.mrb[0].mxu0
  %v768 = vadd.f32 0.0, %v767
  %v769 = vpop.f32.mrb[0].mxu0
  %v770 = vadd.f32 0.0, %v769
  %v771 = vpop.f32.mrb[0].mxu0
  %v772 = vadd.f32 0.0, %v771
  %773 = vdwg.mxu0
  %v776 = vunpack.c.l.b16 %v728
  %v777 = vunpack.c.l.b16 %v729
  %v778 = vpack.c.b16 %v777, %v776
  %780 = vmatprep.subr.bf16.mxu0 %v258
  %781 = vmatpush1.bf16.msra.mxu0 %v257
  %782 = vmatprep.subr.bf16.mxu0 %v260
  %783 = vmatpush1.bf16.msra.mxu0 %v259
  %784 = vmatprep.subr.bf16.mxu0 %v262
  %785 = vmatpush1.bf16.msra.mxu0 %v261
  %786 = vmatprep.subr.bf16.mxu0 %v264
  %787 = vmatpush1.bf16.msra.mxu0 %v263
  %788 = vmatprep.subr.bf16.mxu0 %v266
  %789 = vmatpush1.bf16.msra.mxu0 %v265
  %790 = vmatprep.subr.bf16.mxu0 %v268
  %791 = vmatpush1.bf16.msra.mxu0 %v267
  %792 = vmatprep.subr.bf16.mxu0 %v270
  %793 = vmatpush1.bf16.msra.mxu0 %v269
  %794 = vmatprep.subr.bf16.mxu0 %v272
  %795 = vmatpush1.bf16.msra.mxu0 %v271
  %796 = vmatprep.subr.bf16.mxu0 0
  %797 = vmatpush1.bf16.msra.mxu0 0
  %798 = vmatprep.subr.bf16.mxu0 0
  %799 = vmatpush1.bf16.msra.mxu0 0
  %800 = vmatprep.subr.bf16.mxu0 0
  %801 = vmatpush1.bf16.msra.mxu0 0
  %802 = vmatprep.subr.bf16.mxu0 0
  %803 = vmatpush1.bf16.msra.mxu0 0
  %804 = vmatprep.subr.bf16.mxu0 0
  %805 = vmatpush1.bf16.msra.mxu0 0
  %806 = vmatprep.subr.bf16.mxu0 0
  %807 = vmatpush1.bf16.msra.mxu0 0
  %808 = vmatprep.subr.bf16.mxu0 0
  %809 = vmatpush1.bf16.msra.mxu0 0
  %810 = vmatprep.subr.bf16.mxu0 0
  %811 = vmatpush1.bf16.msra.mxu0 0
  %812 = vmatprep.mubr.bf16.mxu0 0
  %813 = vmatmul.mubr.bf16.gmra.mrb[0].mxu0 %v778
  %v814 = vpop.f32.mrb[0].mxu0
  %v815 = vadd.f32 %v766, %v814
  %v816 = vpop.f32.mrb[0].mxu0
  %v817 = vadd.f32 %v768, %v816
  %v818 = vpop.f32.mrb[0].mxu0
  %v819 = vadd.f32 %v770, %v818
  %v820 = vpop.f32.mrb[0].mxu0
  %v821 = vadd.f32 %v772, %v820
  %822 = vdwg.mxu0
  %v823 = vadd.f32 %v815, %v68
  %v824 = vadd.f32 %v817, %v72
  %v825 = vadd.f32 %v819, %v68
  %v826 = vadd.f32 %v821, %v72
  %827 = vmax.xlane.f32.xlu0 %v824
  %v828 = vpop.xlane.xlu0 %827
  %829 = vmax.xlane.f32.xlu0 %v826
  %v830 = vpop.xlane.xlu0 %829
  %v831 = vsub.f32 %v824, %v828
  %v832 = vsub.f32 %v826, %v830
  %v833 = vmul.f32 %v831, 1.442695
  %v834 = vpow.pop %v833
  %v835 = vmul.f32 %v832, 1.442695
  %v836 = vpow.pop %v835
  %837 = vadd.xlane.f32.xlu0 %v834
  %v838 = vpop.xlane.xlu0 %837
  %839 = vadd.xlane.f32.xlu0 %v836
  %v840 = vpop.xlane.xlu0 %839
  %v841 = vlog2.pop %v838
  %v842 = vmul.f32 %v841, 0.6931472
  %v843 = vlog2.pop %v840
  %v844 = vmul.f32 %v843, 0.6931472
  %v845 = vsub.f32 %v831, %v842
  %v846 = vsub.f32 %v832, %v844
  %s847 = scalar_lea.vmem %s5, 64
  %848 = vst [vmem:[%s847] sm:$0xff] %v845
  %849 = vst [vmem:[%s847 + $0x8] sm:$0xff] %v846
  %s850 = scalar_lea.vmem %s0, 40
  %v851 = vld [vmem:[%s850] sm:$0xf]
  %v852 = vld [vmem:[%s850 + $0x4] sm:$0xf]
  %v853 = vpack.c.bf16 %v825, %v823
  %854 = vmatprep.subr.bf16.mxu0 %v129
  %855 = vmatpush1.bf16.msra.mxu0 %v128
  %856 = vmatprep.subr.bf16.mxu0 %v131
  %857 = vmatpush1.bf16.msra.mxu0 %v130
  %858 = vmatprep.subr.bf16.mxu0 %v133
  %859 = vmatpush1.bf16.msra.mxu0 %v132
  %860 = vmatprep.subr.bf16.mxu0 %v135
  %861 = vmatpush1.bf16.msra.mxu0 %v134
  %862 = vmatprep.subr.bf16.mxu0 %v137
  %863 = vmatpush1.bf16.msra.mxu0 %v136
  %864 = vmatprep.subr.bf16.mxu0 %v139
  %865 = vmatpush1.bf16.msra.mxu0 %v138
  %866 = vmatprep.subr.bf16.mxu0 %v141
  %867 = vmatpush1.bf16.msra.mxu0 %v140
  %868 = vmatprep.subr.bf16.mxu0 %v143
  %869 = vmatpush1.bf16.msra.mxu0 %v142
  %870 = vmatprep.subr.bf16.mxu0 0
  %871 = vmatpush1.bf16.msra.mxu0 0
  %872 = vmatprep.subr.bf16.mxu0 0
  %873 = vmatpush1.bf16.msra.mxu0 0
  %874 = vmatprep.subr.bf16.mxu0 0
  %875 = vmatpush1.bf16.msra.mxu0 0
  %876 = vmatprep.subr.bf16.mxu0 0
  %877 = vmatpush1.bf16.msra.mxu0 0
  %878 = vmatprep.subr.bf16.mxu0 0
  %879 = vmatpush1.bf16.msra.mxu0 0
  %880 = vmatprep.subr.bf16.mxu0 0
  %881 = vmatpush1.bf16.msra.mxu0 0
  %882 = vmatprep.subr.bf16.mxu0 0
  %883 = vmatpush1.bf16.msra.mxu0 0
  %884 = vmatprep.subr.bf16.mxu0 0
  %885 = vmatpush1.bf16.msra.mxu0 0
  %886 = vmatprep.mubr.bf16.mxu0 0
  %887 = vmatmul.mubr.bf16.gmra.mrb[0].mxu0 %v853
  %v888 = vpop.f32.mrb[0].mxu0
  %v889 = vadd.f32 0.0, %v888
  %v890 = vpop.f32.mrb[0].mxu0
  %v891 = vadd.f32 0.0, %v890
  %v892 = vpop.f32.mrb[0].mxu0
  %v893 = vadd.f32 0.0, %v892
  %v894 = vpop.f32.mrb[0].mxu0
  %v895 = vadd.f32 0.0, %v894
  %896 = vdwg.mxu0
  %v899 = vunpack.c.l.b16 %v851
  %v900 = vunpack.c.l.b16 %v852
  %v901 = vpack.c.b16 %v900, %v899
  %903 = vmatprep.subr.bf16.mxu0 %v258
  %904 = vmatpush1.bf16.msra.mxu0 %v257
  %905 = vmatprep.subr.bf16.mxu0 %v260
  %906 = vmatpush1.bf16.msra.mxu0 %v259
  %907 = vmatprep.subr.bf16.mxu0 %v262
  %908 = vmatpush1.bf16.msra.mxu0 %v261
  %909 = vmatprep.subr.bf16.mxu0 %v264
  %910 = vmatpush1.bf16.msra.mxu0 %v263
  %911 = vmatprep.subr.bf16.mxu0 %v266
  %912 = vmatpush1.bf16.msra.mxu0 %v265
  %913 = vmatprep.subr.bf16.mxu0 %v268
  %914 = vmatpush1.bf16.msra.mxu0 %v267
  %915 = vmatprep.subr.bf16.mxu0 %v270
  %916 = vmatpush1.bf16.msra.mxu0 %v269
  %917 = vmatprep.subr.bf16.mxu0 %v272
  %918 = vmatpush1.bf16.msra.mxu0 %v271
  %919 = vmatprep.subr.bf16.mxu0 0
  %920 = vmatpush1.bf16.msra.mxu0 0
  %921 = vmatprep.subr.bf16.mxu0 0
  %922 = vmatpush1.bf16.msra.mxu0 0
  %923 = vmatprep.subr.bf16.mxu0 0
  %924 = vmatpush1.bf16.msra.mxu0 0
  %925 = vmatprep.subr.bf16.mxu0 0
  %926 = vmatpush1.bf16.msra.mxu0 0
  %927 = vmatprep.subr.bf16.mxu0 0
  %928 = vmatpush1.bf16.msra.mxu0 0
  %929 = vmatprep.subr.bf16.mxu0 0
  %930 = vmatpush1.bf16.msra.mxu0 0
  %931 = vmatprep.subr.bf16.mxu0 0
  %932 = vmatpush1.bf16.msra.mxu0 0
  %933 = vmatprep.subr.bf16.mxu0 0
  %934 = vmatpush1.bf16.msra.mxu0 0
  %935 = vmatprep.mubr.bf16.mxu0 0
  %936 = vmatmul.mubr.bf16.gmra.mrb[0].mxu0 %v901
  %v937 = vpop.f32.mrb[0].mxu0
  %v938 = vadd.f32 %v889, %v937
  %v939 = vpop.f32.mrb[0].mxu0
  %v940 = vadd.f32 %v891, %v939
  %v941 = vpop.f32.mrb[0].mxu0
  %v942 = vadd.f32 %v893, %v941
  %v943 = vpop.f32.mrb[0].mxu0
  %v944 = vadd.f32 %v895, %v943
  %945 = vdwg.mxu0
  %v946 = vadd.f32 %v938, %v68
  %v947 = vadd.f32 %v940, %v72
  %v948 = vadd.f32 %v942, %v68
  %v949 = vadd.f32 %v944, %v72
  %950 = vmax.xlane.f32.xlu0 %v947
  %v951 = vpop.xlane.xlu0 %950
  %952 = vmax.xlane.f32.xlu0 %v949
  %v953 = vpop.xlane.xlu0 %952
  %v954 = vsub.f32 %v947, %v951
  %v955 = vsub.f32 %v949, %v953
  %v956 = vmul.f32 %v954, 1.442695
  %v957 = vpow.pop %v956
  %v958 = vmul.f32 %v955, 1.442695
  %v959 = vpow.pop %v958
  %960 = vadd.xlane.f32.xlu0 %v957
  %v961 = vpop.xlane.xlu0 %960
  %962 = vadd.xlane.f32.xlu0 %v959
  %v963 = vpop.xlane.xlu0 %962
  %v964 = vlog2.pop %v961
  %v965 = vmul.f32 %v964, 0.6931472
  %v966 = vlog2.pop %v963
  %v967 = vmul.f32 %v966, 0.6931472
  %v968 = vsub.f32 %v954, %v965
  %v969 = vsub.f32 %v955, %v967
  %s970 = scalar_lea.vmem %s5, 80
  %971 = vst [vmem:[%s970] sm:$0xff] %v968
  %972 = vst [vmem:[%s970 + $0x8] sm:$0xff] %v969
  %s973 = scalar_lea.vmem %s0, 48
  %v974 = vld [vmem:[%s973] sm:$0xf]
  %v975 = vld [vmem:[%s973 + $0x4] sm:$0xf]
  %v976 = vpack.c.bf16 %v948, %v946
  %977 = vmatprep.subr.bf16.mxu0 %v129
  %978 = vmatpush1.bf16.msra.mxu0 %v128
  %979 = vmatprep.subr.bf16.mxu0 %v131
  %980 = vmatpush1.bf16.msra.mxu0 %v130
  %981 = vmatprep.subr.bf16.mxu0 %v133
  %982 = vmatpush1.bf16.msra.mxu0 %v132
  %983 = vmatprep.subr.bf16.mxu0 %v135
  %984 = vmatpush1.bf16.msra.mxu0 %v134
  %985 = vmatprep.subr.bf16.mxu0 %v137
  %986 = vmatpush1.bf16.msra.mxu0 %v136
  %987 = vmatprep.subr.bf16.mxu0 %v139
  %988 = vmatpush1.bf16.msra.mxu0 %v138
  %989 = vmatprep.subr.bf16.mxu0 %v141
  %990 = vmatpush1.bf16.msra.mxu0 %v140
  %991 = vmatprep.subr.bf16.mxu0 %v143
  %992 = vmatpush1.bf16.msra.mxu0 %v142
  %993 = vmatprep.subr.bf16.mxu0 0
  %994 = vmatpush1.bf16.msra.mxu0 0
  %995 = vmatprep.subr.bf16.mxu0 0
  %996 = vmatpush1.bf16.msra.mxu0 0
  %997 = vmatprep.subr.bf16.mxu0 0
  %998 = vmatpush1.bf16.msra.mxu0 0
  %999 = vmatprep.subr.bf16.mxu0 0
  %1000 = vmatpush1.bf16.msra.mxu0 0
  %1001 = vmatprep.subr.bf16.mxu0 0
  %1002 = vmatpush1.bf16.msra.mxu0 0
  %1003 = vmatprep.subr.bf16.mxu0 0
  %1004 = vmatpush1.bf16.msra.mxu0 0
  %1005 = vmatprep.subr.bf16.mxu0 0
  %1006 = vmatpush1.bf16.msra.mxu0 0
  %1007 = vmatprep.subr.bf16.mxu0 0
  %1008 = vmatpush1.bf16.msra.mxu0 0
  %1009 = vmatprep.mubr.bf16.mxu0 0
  %1010 = vmatmul.mubr.bf16.gmra.mrb[0].mxu0 %v976
  %v1011 = vpop.f32.mrb[0].mxu0
  %v1012 = vadd.f32 0.0, %v1011
  %v1013 = vpop.f32.mrb[0].mxu0
  %v1014 = vadd.f32 0.0, %v1013
  %v1015 = vpop.f32.mrb[0].mxu0
  %v1016 = vadd.f32 0.0, %v1015
  %v1017 = vpop.f32.mrb[0].mxu0
  %v1018 = vadd.f32 0.0, %v1017
  %1019 = vdwg.mxu0
  %v1022 = vunpack.c.l.b16 %v974
  %v1023 = vunpack.c.l.b16 %v975
  %v1024 = vpack.c.b16 %v1023, %v1022
  %1026 = vmatprep.subr.bf16.mxu0 %v258
  %1027 = vmatpush1.bf16.msra.mxu0 %v257
  %1028 = vmatprep.subr.bf16.mxu0 %v260
  %1029 = vmatpush1.bf16.msra.mxu0 %v259
  %1030 = vmatprep.subr.bf16.mxu0 %v262
  %1031 = vmatpush1.bf16.msra.mxu0 %v261
  %1032 = vmatprep.subr.bf16.mxu0 %v264
  %1033 = vmatpush1.bf16.msra.mxu0 %v263
  %1034 = vmatprep.subr.bf16.mxu0 %v266
  %1035 = vmatpush1.bf16.msra.mxu0 %v265
  %1036 = vmatprep.subr.bf16.mxu0 %v268
  %1037 = vmatpush1.bf16.msra.mxu0 %v267
  %1038 = vmatprep.subr.bf16.mxu0 %v270
  %1039 = vmatpush1.bf16.msra.mxu0 %v269
  %1040 = vmatprep.subr.bf16.mxu0 %v272
  %1041 = vmatpush1.bf16.msra.mxu0 %v271
  %1042 = vmatprep.subr.bf16.mxu0 0
  %1043 = vmatpush1.bf16.msra.mxu0 0
  %1044 = vmatprep.subr.bf16.mxu0 0
  %1045 = vmatpush1.bf16.msra.mxu0 0
  %1046 = vmatprep.subr.bf16.mxu0 0
  %1047 = vmatpush1.bf16.msra.mxu0 0
  %1048 = vmatprep.subr.bf16.mxu0 0
  %1049 = vmatpush1.bf16.msra.mxu0 0
  %1050 = vmatprep.subr.bf16.mxu0 0
  %1051 = vmatpush1.bf16.msra.mxu0 0
  %1052 = vmatprep.subr.bf16.mxu0 0
  %1053 = vmatpush1.bf16.msra.mxu0 0
  %1054 = vmatprep.subr.bf16.mxu0 0
  %1055 = vmatpush1.bf16.msra.mxu0 0
  %1056 = vmatprep.subr.bf16.mxu0 0
  %1057 = vmatpush1.bf16.msra.mxu0 0
  %1058 = vmatprep.mubr.bf16.mxu0 0
  %1059 = vmatmul.mubr.bf16.gmra.mrb[0].mxu0 %v1024
  %v1060 = vpop.f32.mrb[0].mxu0
  %v1061 = vadd.f32 %v1012, %v1060
  %v1062 = vpop.f32.mrb[0].mxu0
  %v1063 = vadd.f32 %v1014, %v1062
  %v1064 = vpop.f32.mrb[0].mxu0
  %v1065 = vadd.f32 %v1016, %v1064
  %v1066 = vpop.f32.mrb[0].mxu0
  %v1067 = vadd.f32 %v1018, %v1066
  %1068 = vdwg.mxu0
  %v1069 = vadd.f32 %v1061, %v68
  %v1070 = vadd.f32 %v1063, %v72
  %v1071 = vadd.f32 %v1065, %v68
  %v1072 = vadd.f32 %v1067, %v72
  %1073 = vmax.xlane.f32.xlu0 %v1070
  %v1074 = vpop.xlane.xlu0 %1073
  %1075 = vmax.xlane.f32.xlu0 %v1072
  %v1076 = vpop.xlane.xlu0 %1075
  %v1077 = vsub.f32 %v1070, %v1074
  %v1078 = vsub.f32 %v1072, %v1076
  %v1079 = vmul.f32 %v1077, 1.442695
  %v1080 = vpow.pop %v1079
  %v1081 = vmul.f32 %v1078, 1.442695
  %v1082 = vpow.pop %v1081
  %1083 = vadd.xlane.f32.xlu0 %v1080
  %v1084 = vpop.xlane.xlu0 %1083
  %1085 = vadd.xlane.f32.xlu0 %v1082
  %v1086 = vpop.xlane.xlu0 %1085
  %v1087 = vlog2.pop %v1084
  %v1088 = vmul.f32 %v1087, 0.6931472
  %v1089 = vlog2.pop %v1086
  %v1090 = vmul.f32 %v1089, 0.6931472
  %v1091 = vsub.f32 %v1077, %v1088
  %v1092 = vsub.f32 %v1078, %v1090
  %s1093 = scalar_lea.vmem %s5, 96
  %1094 = vst [vmem:[%s1093] sm:$0xff] %v1091
  %1095 = vst [vmem:[%s1093 + $0x8] sm:$0xff] %v1092
  %s1096 = scalar_lea.vmem %s0, 56
  %v1097 = vld [vmem:[%s1096] sm:$0xf]
  %v1098 = vld [vmem:[%s1096 + $0x4] sm:$0xf]
  %v1099 = vpack.c.bf16 %v1071, %v1069
  %1100 = vmatprep.subr.bf16.mxu0 %v129
  %1101 = vmatpush1.bf16.msra.mxu0 %v128
  %1102 = vmatprep.subr.bf16.mxu0 %v131
  %1103 = vmatpush1.bf16.msra.mxu0 %v130
  %1104 = vmatprep.subr.bf16.mxu0 %v133
  %1105 = vmatpush1.bf16.msra.mxu0 %v132
  %1106 = vmatprep.subr.bf16.mxu0 %v135
  %1107 = vmatpush1.bf16.msra.mxu0 %v134
  %1108 = vmatprep.subr.bf16.mxu0 %v137
  %1109 = vmatpush1.bf16.msra.mxu0 %v136
  %1110 = vmatprep.subr.bf16.mxu0 %v139
  %1111 = vmatpush1.bf16.msra.mxu0 %v138
  %1112 = vmatprep.subr.bf16.mxu0 %v141
  %1113 = vmatpush1.bf16.msra.mxu0 %v140
  %1114 = vmatprep.subr.bf16.mxu0 %v143
  %1115 = vmatpush1.bf16.msra.mxu0 %v142
  %1116 = vmatprep.subr.bf16.mxu0 0
  %1117 = vmatpush1.bf16.msra.mxu0 0
  %1118 = vmatprep.subr.bf16.mxu0 0
  %1119 = vmatpush1.bf16.msra.mxu0 0
  %1120 = vmatprep.subr.bf16.mxu0 0
  %1121 = vmatpush1.bf16.msra.mxu0 0
  %1122 = vmatprep.subr.bf16.mxu0 0
  %1123 = vmatpush1.bf16.msra.mxu0 0
  %1124 = vmatprep.subr.bf16.mxu0 0
  %1125 = vmatpush1.bf16.msra.mxu0 0
  %1126 = vmatprep.subr.bf16.mxu0 0
  %1127 = vmatpush1.bf16.msra.mxu0 0
  %1128 = vmatprep.subr.bf16.mxu0 0
  %1129 = vmatpush1.bf16.msra.mxu0 0
  %1130 = vmatprep.subr.bf16.mxu0 0
  %1131 = vmatpush1.bf16.msra.mxu0 0
  %1132 = vmatprep.mubr.bf16.mxu0 0
  %1133 = vmatmul.mubr.bf16.gmra.mrb[0].mxu0 %v1099
  %v1134 = vpop.f32.mrb[0].mxu0
  %v1135 = vadd.f32 0.0, %v1134
  %v1136 = vpop.f32.mrb[0].mxu0
  %v1137 = vadd.f32 0.0, %v1136
  %v1138 = vpop.f32.mrb[0].mxu0
  %v1139 = vadd.f32 0.0, %v1138
  %v1140 = vpop.f32.mrb[0].mxu0
  %v1141 = vadd.f32 0.0, %v1140
  %1142 = vdwg.mxu0
  %v1145 = vunpack.c.l.b16 %v1097
  %v1146 = vunpack.c.l.b16 %v1098
  %v1147 = vpack.c.b16 %v1146, %v1145
  %1149 = vmatprep.subr.bf16.mxu0 %v258
  %1150 = vmatpush1.bf16.msra.mxu0 %v257
  %1151 = vmatprep.subr.bf16.mxu0 %v260
  %1152 = vmatpush1.bf16.msra.mxu0 %v259
  %1153 = vmatprep.subr.bf16.mxu0 %v262
  %1154 = vmatpush1.bf16.msra.mxu0 %v261
  %1155 = vmatprep.subr.bf16.mxu0 %v264
  %1156 = vmatpush1.bf16.msra.mxu0 %v263
  %1157 = vmatprep.subr.bf16.mxu0 %v266
  %1158 = vmatpush1.bf16.msra.mxu0 %v265
  %1159 = vmatprep.subr.bf16.mxu0 %v268
  %1160 = vmatpush1.bf16.msra.mxu0 %v267
  %1161 = vmatprep.subr.bf16.mxu0 %v270
  %1162 = vmatpush1.bf16.msra.mxu0 %v269
  %1163 = vmatprep.subr.bf16.mxu0 %v272
  %1164 = vmatpush1.bf16.msra.mxu0 %v271
  %1165 = vmatprep.subr.bf16.mxu0 0
  %1166 = vmatpush1.bf16.msra.mxu0 0
  %1167 = vmatprep.subr.bf16.mxu0 0
  %1168 = vmatpush1.bf16.msra.mxu0 0
  %1169 = vmatprep.subr.bf16.mxu0 0
  %1170 = vmatpush1.bf16.msra.mxu0 0
  %1171 = vmatprep.subr.bf16.mxu0 0
  %1172 = vmatpush1.bf16.msra.mxu0 0
  %1173 = vmatprep.subr.bf16.mxu0 0
  %1174 = vmatpush1.bf16.msra.mxu0 0
  %1175 = vmatprep.subr.bf16.mxu0 0
  %1176 = vmatpush1.bf16.msra.mxu0 0
  %1177 = vmatprep.subr.bf16.mxu0 0
  %1178 = vmatpush1.bf16.msra.mxu0 0
  %1179 = vmatprep.subr.bf16.mxu0 0
  %1180 = vmatpush1.bf16.msra.mxu0 0
  %1181 = vmatprep.mubr.bf16.mxu0 0
  %1182 = vmatmul.mubr.bf16.gmra.mrb[0].mxu0 %v1147
  %v1183 = vpop.f32.mrb[0].mxu0
  %v1184 = vadd.f32 %v1135, %v1183
  %v1185 = vpop.f32.mrb[0].mxu0
  %v1186 = vadd.f32 %v1137, %v1185
  %v1187 = vpop.f32.mrb[0].mxu0
  %v1188 = vadd.f32 %v1139, %v1187
  %v1189 = vpop.f32.mrb[0].mxu0
  %v1190 = vadd.f32 %v1141, %v1189
  %1191 = vdwg.mxu0
  %v1192 = vadd.f32 %v1184, %v68
  %v1193 = vadd.f32 %v1186, %v72
  %v1194 = vadd.f32 %v1188, %v68
  %v1195 = vadd.f32 %v1190, %v72
  %1196 = vmax.xlane.f32.xlu0 %v1193
  %v1197 = vpop.xlane.xlu0 %1196
  %1198 = vmax.xlane.f32.xlu0 %v1195
  %v1199 = vpop.xlane.xlu0 %1198
  %v1200 = vsub.f32 %v1193, %v1197
  %v1201 = vsub.f32 %v1195, %v1199
  %v1202 = vmul.f32 %v1200, 1.442695
  %v1203 = vpow.pop %v1202
  %v1204 = vmul.f32 %v1201, 1.442695
  %v1205 = vpow.pop %v1204
  %1206 = vadd.xlane.f32.xlu0 %v1203
  %v1207 = vpop.xlane.xlu0 %1206
  %1208 = vadd.xlane.f32.xlu0 %v1205
  %v1209 = vpop.xlane.xlu0 %1208
  %v1210 = vlog2.pop %v1207
  %v1211 = vmul.f32 %v1210, 0.6931472
  %v1212 = vlog2.pop %v1209
  %v1213 = vmul.f32 %v1212, 0.6931472
  %v1214 = vsub.f32 %v1200, %v1211
  %v1215 = vsub.f32 %v1201, %v1213
  %s1216 = scalar_lea.vmem %s5, 112
  %1217 = vst [vmem:[%s1216] sm:$0xff] %v1214
  %1218 = vst [vmem:[%s1216 + $0x8] sm:$0xff] %v1215
  %1219 = vst [vmem:[%s6] sm:$0xff] %v1192
  %1220 = vst [vmem:[%s6 + $0x8] sm:$0xff] %v1194
  // Predicated region
  $region26: #{rnn_sequence.1} parent=0 // pred_check
    _
  $region27: #{rnn_sequence.1} parent=0 // pred_check_branch
    %1222 = sbr.rel (0) target = $region29
  $region28: #{rnn_sequence.1} parent=0 // pred_region
    _
  $region29: #{rnn_sequence.1} parent=0 // pred_fallthru
    _
  // Predicated region
  $region30: #{rnn_sequence.1} parent=0 // pred_check
    _
  $region31: #{rnn_sequence.1} parent=0 // pred_check_branch
    %1224 = sbr.rel (0) target = $region33
  $region32: #{rnn_sequence.1} parent=0 // pred_region
    _
  $region33: #{rnn_sequence.1} parent=0 // pred_fallthru
    _
  // Predicated region
  $region34: #{rnn_sequence.1} parent=0 // pred_check
    _
  $region35: #{rnn_sequence.1} parent=0 // pred_check_branch
    %1226 = sbr.rel (0) target = $region37
  $region36: #{rnn_sequence.1} parent=0 // pred_region
    _
  $region37: #{rnn_sequence.1} parent=0 // pred_fallthru
    _
  // Predicated region
  $region38: #{rnn_sequence.1} parent=0 // pred_check
    _
  $region39: #{rnn_sequence.1} parent=0 // pred_check_branch
    %1228 = sbr.rel (0) target = $region41
  $region40: #{rnn_sequence.1} parent=0 // pred_region
    _
  $region41: #{rnn_sequence.1} parent=0 // pred_fallthru
    _

</llo_original>
